<compile_context>
chip_gen: v7x
topology: tpu7x:2x2x1
jax: 0.10.0
libtpu: 0.0.40
codegen_flags: <defaults>
</compile_context>

<pallas_src>
import functools

import jax
import jax.numpy as jnp
from jax.experimental import pallas as pl
from jax.experimental.pallas import tpu as pltpu

KERNEL_SIZE = 3
RELU_SLOPE = 0.2
BN_EPS = 1e-5


def _convblock_kernel(x_ref, w_ref, gb_ref, out_ref,
                      patch_ref, cache_ref, sum_ref, sq_ref, ab_ref,
                      *, nb, h, w, c_in, c_out, m_total):
    """One grid step of grid = (phase, batch_tile).

    x_ref    : [nb, C_in, (H+2)*W + 2]  H-padded, row-flattened, end-padded images
    w_ref    : [C_out, 9*C_in]          weights, K index = (di*3+dj)*C_in + c
    gb_ref   : [C_out, 2]               gamma | beta packed
    out_ref  : [nb, C_out, H*W]         lane-dense output block (NCHW after reshape)
    patch_ref: [9*C_in, H*W]            im2col patch scratch (reused per image)
    cache_ref: [N, C_out, H*W]          conv cache persisted phase 0 -> phase 1
    sum_ref, sq_ref: [C_out, 1]         persistent per-channel sum / sum-of-squares
    ab_ref   : [C_out, 2]               persistent folded BN scale | shift
    """
    phase = pl.program_id(0)
    tile = pl.program_id(1)
    hw = h * w

    # ---------------- phase 0: conv + global BatchNorm statistics ----------------
    @pl.when(jnp.logical_and(phase == 0, tile == 0))
    def _init_stats():
        sum_ref[...] = jnp.zeros_like(sum_ref)
        sq_ref[...] = jnp.zeros_like(sq_ref)

    @pl.when(phase == 0)
    def _conv_and_stats():
        # Column masks: the flattened-row trick makes dj=0 / dj=2 taps read one
        # element from the neighbouring image row; zero it to emulate width padding.
        col = jax.lax.broadcasted_iota(jnp.int32, (c_in, hw), 1) % w
        keep_left = col != 0            # dj == 0 taps
        keep_right = col != (w - 1)     # dj == 2 taps

        for b in range(nb):                                    # static unroll
            # Build the lane-dense [9*C_in, H*W] patch: each tap is a contiguous
            # static slice of the flattened padded image (no reshape, no transpose).
            for t in range(KERNEL_SIZE * KERNEL_SIZE):
                di, dj = t // KERNEL_SIZE, t % KERNEL_SIZE
                start = di * w + dj                            # static lane offset
                x_tap = x_ref[b, :, start:start + hw]          # [C_in, H*W]
                if dj == 0:
                    x_tap = jnp.where(keep_left, x_tap, 0.0)
                elif dj == 2:
                    x_tap = jnp.where(keep_right, x_tap, 0.0)
                patch_ref[t * c_in:(t + 1) * c_in, :] = x_tap
            # Single fused MXU contraction, K = 9*C_in.
            conv = jax.lax.dot_general(
                w_ref[...], patch_ref[...],
                (((1,), (0,)), ((), ())),
                preferred_element_type=jnp.float32)            # [C_out, H*W]
            img = tile * nb + b
            cache_ref[pl.ds(img, 1), :, :] = conv[None]        # cache for phase 1
            sum_ref[...] += jnp.sum(conv, axis=1, keepdims=True)
            sq_ref[...] += jnp.sum(conv * conv, axis=1, keepdims=True)

    # -------- phase 1: fold affine once, then normalize + LeakyReLU --------
    @pl.when(jnp.logical_and(phase == 1, tile == 0))
    def _finalize_stats():
        inv_m = 1.0 / float(m_total)
        mean = sum_ref[...] * inv_m                            # [C_out, 1]
        var = sq_ref[...] * inv_m - mean * mean                # biased var (BN train)
        inv_std = jax.lax.rsqrt(var + BN_EPS)                  # once per channel (EUP)
        a = gb_ref[:, 0:1] * inv_std                           # gamma * inv_std
        ab_ref[:, 0:1] = a
        ab_ref[:, 1:2] = gb_ref[:, 1:2] - mean * a             # beta - mean * a

    @pl.when(phase == 1)
    def _normalize_store():
        scale = ab_ref[:, 0:1]
        shift = ab_ref[:, 1:2]
        for b in range(nb):                                    # static unroll
            img = tile * nb + b
            conv = cache_ref[pl.ds(img, 1), :, :][0]           # cached, no recompute
            y = conv * scale + shift                           # folded BN affine
            out_ref[b, :, :] = jnp.where(y >= 0, y, RELU_SLOPE * y)   # LeakyReLU(0.2)


def conv_block_forward(x, weight, bias, gamma, beta, *, images_per_tile=None):
    """ConvBlock forward. x: [N, C_in, H, W] (NCHW). Returns [N, C_out, H, W].

    `bias` is accepted for interface parity but NOT passed to the kernel: a per-channel
    constant added before train-mode BatchNorm cancels exactly (mean subtraction).
    """
    del bias
    n, c_in, h, w = x.shape
    c_out = weight.shape[0]
    hw = h * w
    k_taps = KERNEL_SIZE * KERNEL_SIZE

    nb = n if images_per_tile is None else min(images_per_tile, n)
    assert n % nb == 0, "batch must be divisible by images_per_tile"
    num_tiles = n // nb

    # HBM-side prep (no transpose, ~1x input bytes, XLA-fused):
    #   pad H by 1 on each side, flatten (H+2, W) row-major (free), pad one element at
    #   each end so every 3x3 tap is a contiguous length-H*W slice of the flat row.
    x_f32 = x.astype(jnp.float32)
    x_flat = jnp.pad(x_f32, ((0, 0), (0, 0), (1, 1), (0, 0))).reshape(n, c_in, (h + 2) * w)
    x_flat = jnp.pad(x_flat, ((0, 0), (0, 0), (1, 1)))         # [N, C_in, (H+2)*W + 2]
    flat_len = (h + 2) * w + 2

    # Weights as one [C_out, 9*C_in] matrix; K index = (di*3 + dj)*C_in + c.
    w_mat = jnp.transpose(weight, (0, 2, 3, 1)).reshape(
        c_out, k_taps * c_in).astype(jnp.float32)

    # gamma/beta packed into one small VMEM input (single DMA descriptor).
    gb = jnp.stack([gamma, beta], axis=1).astype(jnp.float32)  # [C_out, 2]

    kernel = functools.partial(_convblock_kernel, nb=nb, h=h, w=w,
                               c_in=c_in, c_out=c_out, m_total=n * hw)

    out_flat = pl.pallas_call(
        kernel,
        out_shape=jax.ShapeDtypeStruct((n, c_out, hw), jnp.float32),
        grid_spec=pltpu.PrefetchScalarGridSpec(
            num_scalar_prefetch=0,
            grid=(2, num_tiles),                                # (phase, batch tile)
            in_specs=[
                # Pin the input block during phase 1 (cache is used, no re-fetch).
                pl.BlockSpec((nb, c_in, flat_len), lambda p, i: (i * (1 - p), 0, 0)),
                pl.BlockSpec((c_out, k_taps * c_in), lambda p, i: (0, 0)),
                pl.BlockSpec((c_out, 2), lambda p, i: (0, 0)),
            ],
            # Pin the output block during phase 0 -> never written back before phase 1
            # fully writes it (block index stays 0 across the phase boundary).
            out_specs=pl.BlockSpec((nb, c_out, hw), lambda p, i: (i * p, 0, 0)),
            scratch_shapes=[
                pltpu.VMEM((k_taps * c_in, hw), jnp.float32),   # im2col patch tile
                pltpu.VMEM((n, c_out, hw), jnp.float32),        # conv cache (all imgs)
                pltpu.VMEM((c_out, 1), jnp.float32),            # per-channel sum
                pltpu.VMEM((c_out, 1), jnp.float32),            # per-channel sum of sq
                pltpu.VMEM((c_out, 2), jnp.float32),            # folded (scale, shift)
            ],
        ),
        compiler_params=pltpu.CompilerParams(
            # Stats are a global reduction; phase 0 must fully precede phase 1.
            dimension_semantics=("arbitrary", "arbitrary"),
        ),
    )(x_flat, w_mat, gb)

    # [N, C_out, H*W] -> NCHW via a free reshape (no transpose, no extra HBM pass).
    return out_flat.reshape(n, c_out, h, w)


def reference_forward(x, weight, bias, gamma, beta):
    """Pure-JAX reference of Conv2d(3,1,1) + BatchNorm2d(train) + LeakyReLU(0.2)."""
    conv = jax.lax.conv_general_dilated(
        x, weight, window_strides=(1, 1), padding=((1, 1), (1, 1)),
        dimension_numbers=("NCHW", "OIHW", "NCHW"))
    conv = conv + bias[None, :, None, None]
    mean = conv.mean(axis=(0, 2, 3), keepdims=True)
    var = ((conv - mean) ** 2).mean(axis=(0, 2, 3), keepdims=True)
    y = (conv - mean) * jax.lax.rsqrt(var + BN_EPS)
    y = y * gamma[None, :, None, None] + beta[None, :, None, None]
    return jnp.where(y >= 0, y, RELU_SLOPE * y)


if __name__ == "__main__":
    # Small shapes consistent with ConvBlock(in_fea=4, out_fea=8).
    N, C_IN, C_OUT, H, W = 2, 4, 8, 16, 16

    key = jax.random.PRNGKey(0)
    kx, kw, kb, kg, kbt = jax.random.split(key, 5)

    x = jax.random.normal(kx, (N, C_IN, H, W), dtype=jnp.float32)

    fan_in = C_IN * KERNEL_SIZE * KERNEL_SIZE
    bound = 1.0 / jnp.sqrt(fan_in)
    weight = jax.random.uniform(kw, (C_OUT, C_IN, KERNEL_SIZE, KERNEL_SIZE),
                                minval=-bound, maxval=bound, dtype=jnp.float32)
    bias = jax.random.uniform(kb, (C_OUT,), minval=-bound, maxval=bound,
                              dtype=jnp.float32)
    # Non-trivial BN affine (exercises the folded scale/shift path).
    gamma = jax.random.uniform(kg, (C_OUT,), minval=0.5, maxval=1.5, dtype=jnp.float32)
    beta = jax.random.uniform(kbt, (C_OUT,), minval=-0.5, maxval=0.5, dtype=jnp.float32)

    out = conv_block_forward(x, weight, bias, gamma, beta)
    out = jax.block_until_ready(out)

    ref = reference_forward(x, weight, bias, gamma, beta)
    assert out.shape == (N, C_OUT, H, W)
    assert jnp.allclose(out, ref, atol=1e-4, rtol=1e-4), "mismatch vs reference"

    # TODO(synk): Dropout2d branch (dropout=None by default) is omitted.
    print("KERNEL_OK")
</pallas_src>

<mosaic_0001>
module attributes {stable_mosaic.version = 11 : i64} {
  func.func @_convblock_kernel(%arg0: i32, %arg1: i32, %arg2: memref<2x4x290xf32, #tpu.memory_space<vmem>>, %arg3: memref<8x36xf32, #tpu.memory_space<vmem>>, %arg4: memref<8x2xf32, #tpu.memory_space<vmem>>, %arg5: memref<2x8x256xf32, #tpu.memory_space<vmem>>, %arg6: memref<36x256xf32, #tpu.memory_space<vmem>>, %arg7: memref<2x8x256xf32, #tpu.memory_space<vmem>>, %arg8: memref<8x1xf32, #tpu.memory_space<vmem>>, %arg9: memref<8x1xf32, #tpu.memory_space<vmem>>, %arg10: memref<8x2xf32, #tpu.memory_space<vmem>>) attributes {dimension_semantics = [#tpu.dimension_semantics<arbitrary>, #tpu.dimension_semantics<arbitrary>], iteration_bounds = array<i64: 2, 1>, scalar_prefetch = 0 : i64, scratch_operands = 5 : i64, tpu.core_type = #tpu.core_type<tc>, window_params = [{transform_indices = @transform_0, window_bounds = array<i64: 2, 4, 290>}, {pipeline_mode = #tpu.pipeline_mode<synchronous>, transform_indices = @transform_1, window_bounds = array<i64: 8, 36>}, {pipeline_mode = #tpu.pipeline_mode<synchronous>, transform_indices = @transform_2, window_bounds = array<i64: 8, 2>}, {transform_indices = @transform_3, window_bounds = array<i64: 2, 8, 256>}]} {
    %c0_i32 = arith.constant 0 : i32
    %0 = arith.cmpi eq, %arg0, %c0_i32 : i32
    %c0_i32_0 = arith.constant 0 : i32
    %1 = arith.cmpi eq, %arg1, %c0_i32_0 : i32
    %2 = arith.andi %0, %1 : i1
    %3 = arith.extui %2 : i1 to i32
    %c0_i32_1 = arith.constant 0 : i32
    %4 = arith.cmpi ne, %3, %c0_i32_1 : i32
    scf.if %4 {
      %cst = arith.constant 0.000000e+00 : f32
      %16 = vector.broadcast %cst : f32 to vector<8x1xf32>
      %c0 = arith.constant 0 : index
      %c0_8 = arith.constant 0 : index
      %17 = vector.load %arg8[%c0, %c0_8] : memref<8x1xf32, #tpu.memory_space<vmem>>, vector<8x1xf32>
      tpu.vector_store %arg8[%c0, %c0_8], %16 {strides = array<i32>} : memref<8x1xf32, #tpu.memory_space<vmem>>, vector<8x1xf32>,
      %cst_9 = arith.constant 0.000000e+00 : f32
      %18 = vector.broadcast %cst_9 : f32 to vector<8x1xf32>
      %c0_10 = arith.constant 0 : index
      %c0_11 = arith.constant 0 : index
      %19 = vector.load %arg9[%c0_10, %c0_11] : memref<8x1xf32, #tpu.memory_space<vmem>>, vector<8x1xf32>
      tpu.vector_store %arg9[%c0_10, %c0_11], %18 {strides = array<i32>} : memref<8x1xf32, #tpu.memory_space<vmem>>, vector<8x1xf32>,
    } else {
    }
    %c0_i32_2 = arith.constant 0 : i32
    %5 = arith.cmpi eq, %arg0, %c0_i32_2 : i32
    %6 = arith.extui %5 : i1 to i32
    %c0_i32_3 = arith.constant 0 : i32
    %7 = arith.cmpi ne, %6, %c0_i32_3 : i32
    scf.if %7 {
      %16 = tpu.iota {dimensions = array<i32: 1>} : vector<4x256xi32>
      %c16_i32 = arith.constant 16 : i32
      %c0_i32_8 = arith.constant 0 : i32
      %17 = arith.cmpi eq, %c16_i32, %c0_i32_8 : i32
      %c1_i32_9 = arith.constant 1 : i32
      %18 = arith.select %17, %c1_i32_9, %c16_i32 : i32
      %19 = vector.broadcast %18 : i32 to vector<4x256xi32>
      %20 = arith.remsi %16, %19 : vector<4x256xi32>
      %c0_i32_10 = arith.constant 0 : i32
      %21 = vector.broadcast %c0_i32_10 : i32 to vector<4x256xi32>
      %22 = arith.cmpi ne, %20, %21 : vector<4x256xi32>
      %c0_i32_11 = arith.constant 0 : i32
      %23 = vector.broadcast %c0_i32_11 : i32 to vector<4x256xi32>
      %24 = arith.cmpi slt, %20, %23 : vector<4x256xi32>
      %c0_i32_12 = arith.constant 0 : i32
      %25 = arith.cmpi slt, %18, %c0_i32_12 : i32
      %26 = vector.broadcast %25 : i1 to vector<4x256xi1>
      %27 = vector.broadcast %26 : vector<4x256xi1> to vector<4x256xi1>
      %28 = arith.xori %24, %27 : vector<4x256xi1>
      %29 = arith.andi %28, %22 : vector<4x256xi1>
      %30 = vector.broadcast %18 : i32 to vector<4x256xi32>
      %31 = arith.addi %20, %30 : vector<4x256xi32>
      %32 = arith.select %29, %31, %20 : vector<4x256xi1>, vector<4x256xi32>
      %c0_i32_13 = arith.constant 0 : i32
      %33 = vector.broadcast %c0_i32_13 : i32 to vector<4x256xi32>
      %34 = arith.cmpi ne, %32, %33 : vector<4x256xi32>
      %c15_i32 = arith.constant 15 : i32
      %35 = vector.broadcast %c15_i32 : i32 to vector<4x256xi32>
      %36 = arith.cmpi ne, %32, %35 : vector<4x256xi32>
      %c0 = arith.constant 0 : index
      %c0_14 = arith.constant 0 : index
      %c0_15 = arith.constant 0 : index
      %37 = vector.load %arg2[%c0, %c0_14, %c0_15] : memref<2x4x290xf32, #tpu.memory_space<vmem>>, vector<1x4x256xf32>
      %38 = vector.shape_cast %37 : vector<1x4x256xf32> to vector<4x256xf32>
      %cst = arith.constant 0.000000e+00 : f32
      %39 = vector.broadcast %cst : f32 to vector<4x256xf32>
      %40 = arith.select %34, %38, %39 : vector<4x256xi1>, vector<4x256xf32>
      %c0_16 = arith.constant 0 : index
      %c0_17 = arith.constant 0 : index
      %41 = vector.load %arg6[%c0_16, %c0_17] : memref<36x256xf32, #tpu.memory_space<vmem>>, vector<4x256xf32>
      tpu.vector_store %arg6[%c0_16, %c0_17], %40 {strides = array<i32>} : memref<36x256xf32, #tpu.memory_space<vmem>>, vector<4x256xf32>,
      %c0_18 = arith.constant 0 : index
      %c0_19 = arith.constant 0 : index
      %c1 = arith.constant 1 : index
      %42 = vector.load %arg2[%c0_18, %c0_19, %c1] : memref<2x4x290xf32, #tpu.memory_space<vmem>>, vector<1x4x256xf32>
      %43 = vector.shape_cast %42 : vector<1x4x256xf32> to vector<4x256xf32>
      %c4 = arith.constant 4 : index
      %c0_20 = arith.constant 0 : index
      %44 = vector.load %arg6[%c4, %c0_20] : memref<36x256xf32, #tpu.memory_space<vmem>>, vector<4x256xf32>
      tpu.vector_store %arg6[%c4, %c0_20], %43 {strides = array<i32>} : memref<36x256xf32, #tpu.memory_space<vmem>>, vector<4x256xf32>,
      %c0_21 = arith.constant 0 : index
      %c0_22 = arith.constant 0 : index
      %c2 = arith.constant 2 : index
      %45 = vector.load %arg2[%c0_21, %c0_22, %c2] : memref<2x4x290xf32, #tpu.memory_space<vmem>>, vector<1x4x256xf32>
      %46 = vector.shape_cast %45 : vector<1x4x256xf32> to vector<4x256xf32>
      %cst_23 = arith.constant 0.000000e+00 : f32
      %47 = vector.broadcast %cst_23 : f32 to vector<4x256xf32>
      %48 = arith.select %36, %46, %47 : vector<4x256xi1>, vector<4x256xf32>
      %c8 = arith.constant 8 : index
      %c0_24 = arith.constant 0 : index
      %49 = vector.load %arg6[%c8, %c0_24] : memref<36x256xf32, #tpu.memory_space<vmem>>, vector<4x256xf32>
      tpu.vector_store %arg6[%c8, %c0_24], %48 {strides = array<i32>} : memref<36x256xf32, #tpu.memory_space<vmem>>, vector<4x256xf32>,
      %c0_25 = arith.constant 0 : index
      %c0_26 = arith.constant 0 : index
      %c16 = arith.constant 16 : index
      %50 = vector.load %arg2[%c0_25, %c0_26, %c16] : memref<2x4x290xf32, #tpu.memory_space<vmem>>, vector<1x4x256xf32>
      %51 = vector.shape_cast %50 : vector<1x4x256xf32> to vector<4x256xf32>
      %cst_27 = arith.constant 0.000000e+00 : f32
      %52 = vector.broadcast %cst_27 : f32 to vector<4x256xf32>
      %53 = arith.select %34, %51, %52 : vector<4x256xi1>, vector<4x256xf32>
      %c12 = arith.constant 12 : index
      %c0_28 = arith.constant 0 : index
      %54 = vector.load %arg6[%c12, %c0_28] : memref<36x256xf32, #tpu.memory_space<vmem>>, vector<4x256xf32>
      tpu.vector_store %arg6[%c12, %c0_28], %53 {strides = array<i32>} : memref<36x256xf32, #tpu.memory_space<vmem>>, vector<4x256xf32>,
      %c0_29 = arith.constant 0 : index
      %c0_30 = arith.constant 0 : index
      %c17 = arith.constant 17 : index
      %55 = vector.load %arg2[%c0_29, %c0_30, %c17] : memref<2x4x290xf32, #tpu.memory_space<vmem>>, vector<1x4x256xf32>
      %56 = vector.shape_cast %55 : vector<1x4x256xf32> to vector<4x256xf32>
      %c16_31 = arith.constant 16 : index
      %c0_32 = arith.constant 0 : index
      %57 = vector.load %arg6[%c16_31, %c0_32] : memref<36x256xf32, #tpu.memory_space<vmem>>, vector<4x256xf32>
      tpu.vector_store %arg6[%c16_31, %c0_32], %56 {strides = array<i32>} : memref<36x256xf32, #tpu.memory_space<vmem>>, vector<4x256xf32>,
      %c0_33 = arith.constant 0 : index
      %c0_34 = arith.constant 0 : index
      %c18 = arith.constant 18 : index
      %58 = vector.load %arg2[%c0_33, %c0_34, %c18] : memref<2x4x290xf32, #tpu.memory_space<vmem>>, vector<1x4x256xf32>
      %59 = vector.shape_cast %58 : vector<1x4x256xf32> to vector<4x256xf32>
      %cst_35 = arith.constant 0.000000e+00 : f32
      %60 = vector.broadcast %cst_35 : f32 to vector<4x256xf32>
      %61 = arith.select %36, %59, %60 : vector<4x256xi1>, vector<4x256xf32>
      %c20 = arith.constant 20 : index
      %c0_36 = arith.constant 0 : index
      %62 = vector.load %arg6[%c20, %c0_36] : memref<36x256xf32, #tpu.memory_space<vmem>>, vector<4x256xf32>
      tpu.vector_store %arg6[%c20, %c0_36], %61 {strides = array<i32>} : memref<36x256xf32, #tpu.memory_space<vmem>>, vector<4x256xf32>,
      %c0_37 = arith.constant 0 : index
      %c0_38 = arith.constant 0 : index
      %c32 = arith.constant 32 : index
      %63 = vector.load %arg2[%c0_37, %c0_38, %c32] : memref<2x4x290xf32, #tpu.memory_space<vmem>>, vector<1x4x256xf32>
      %64 = vector.shape_cast %63 : vector<1x4x256xf32> to vector<4x256xf32>
      %cst_39 = arith.constant 0.000000e+00 : f32
      %65 = vector.broadcast %cst_39 : f32 to vector<4x256xf32>
      %66 = arith.select %34, %64, %65 : vector<4x256xi1>, vector<4x256xf32>
      %c24 = arith.constant 24 : index
      %c0_40 = arith.constant 0 : index
      %67 = vector.load %arg6[%c24, %c0_40] : memref<36x256xf32, #tpu.memory_space<vmem>>, vector<4x256xf32>
      tpu.vector_store %arg6[%c24, %c0_40], %66 {strides = array<i32>} : memref<36x256xf32, #tpu.memory_space<vmem>>, vector<4x256xf32>,
      %c0_41 = arith.constant 0 : index
      %c0_42 = arith.constant 0 : index
      %c33 = arith.constant 33 : index
      %68 = vector.load %arg2[%c0_41, %c0_42, %c33] : memref<2x4x290xf32, #tpu.memory_space<vmem>>, vector<1x4x256xf32>
      %69 = vector.shape_cast %68 : vector<1x4x256xf32> to vector<4x256xf32>
      %c28 = arith.constant 28 : index
      %c0_43 = arith.constant 0 : index
      %70 = vector.load %arg6[%c28, %c0_43] : memref<36x256xf32, #tpu.memory_space<vmem>>, vector<4x256xf32>
      tpu.vector_store %arg6[%c28, %c0_43], %69 {strides = array<i32>} : memref<36x256xf32, #tpu.memory_space<vmem>>, vector<4x256xf32>,
      %c0_44 = arith.constant 0 : index
      %c0_45 = arith.constant 0 : index
      %c34 = arith.constant 34 : index
      %71 = vector.load %arg2[%c0_44, %c0_45, %c34] : memref<2x4x290xf32, #tpu.memory_space<vmem>>, vector<1x4x256xf32>
      %72 = vector.shape_cast %71 : vector<1x4x256xf32> to vector<4x256xf32>
      %cst_46 = arith.constant 0.000000e+00 : f32
      %73 = vector.broadcast %cst_46 : f32 to vector<4x256xf32>
      %74 = arith.select %36, %72, %73 : vector<4x256xi1>, vector<4x256xf32>
      %c32_47 = arith.constant 32 : index
      %c0_48 = arith.constant 0 : index
      %75 = vector.load %arg6[%c32_47, %c0_48] : memref<36x256xf32, #tpu.memory_space<vmem>>, vector<4x256xf32>
      tpu.vector_store %arg6[%c32_47, %c0_48], %74 {strides = array<i32>} : memref<36x256xf32, #tpu.memory_space<vmem>>, vector<4x256xf32>,
      %c0_49 = arith.constant 0 : index
      %c0_50 = arith.constant 0 : index
      %76 = vector.load %arg3[%c0_49, %c0_50] : memref<8x36xf32, #tpu.memory_space<vmem>>, vector<8x36xf32>
      %c0_51 = arith.constant 0 : index
      %c0_52 = arith.constant 0 : index
      %77 = vector.load %arg6[%c0_51, %c0_52] : memref<36x256xf32, #tpu.memory_space<vmem>>, vector<36x256xf32>
      %cst_53 = arith.constant dense<0.000000e+00> : vector<8x256xf32>
      %78 = tpu.matmul %76, %77, %cst_53 {dimension_numbers = #tpu.dot_dimension_numbers<[1], [0], [0], [1], [0, 0, 1, 1], [], []>} : vector<8x36xf32>, vector<36x256xf32>, vector<8x256xf32> -> vector<8x256xf32>
      %c2_i32 = arith.constant 2 : i32
      %79 = arith.muli %arg1, %c2_i32 : i32
      %c0_i32_54 = arith.constant 0 : i32
      %80 = arith.addi %79, %c0_i32_54 : i32
      %81 = vector.shape_cast %78 : vector<8x256xf32> to vector<1x8x256xf32>
      %82 = arith.index_cast %80 : i32 to index
      %c0_55 = arith.constant 0 : index
      %c0_56 = arith.constant 0 : index
      %83 = vector.load %arg7[%82, %c0_55, %c0_56] : memref<2x8x256xf32, #tpu.memory_space<vmem>>, vector<1x8x256xf32>
      tpu.vector_store %arg7[%82, %c0_55, %c0_56], %81 {strides = array<i32>} : memref<2x8x256xf32, #tpu.memory_space<vmem>>, vector<1x8x256xf32>,
      %c0_57 = arith.constant 0 : index
      %c0_58 = arith.constant 0 : index
      %84 = vector.load %arg8[%c0_57, %c0_58] : memref<8x1xf32, #tpu.memory_space<vmem>>, vector<8x1xf32>
      %cst_59 = arith.constant dense<0.000000e+00> : vector<8xf32>
      %85 = vector.multi_reduction <add>, %78, %cst_59 [1] : vector<8x256xf32> to vector<8xf32>
      %86 = vector.shape_cast %85 : vector<8xf32> to vector<8x1xf32>
      %87 = arith.addf %84, %86 : vector<8x1xf32>
      %c0_60 = arith.constant 0 : index
      %c0_61 = arith.constant 0 : index
      %88 = vector.load %arg8[%c0_60, %c0_61] : memref<8x1xf32, #tpu.memory_space<vmem>>, vector<8x1xf32>
      tpu.vector_store %arg8[%c0_60, %c0_61], %87 {strides = array<i32>} : memref<8x1xf32, #tpu.memory_space<vmem>>, vector<8x1xf32>,
      %c0_62 = arith.constant 0 : index
      %c0_63 = arith.constant 0 : index
      %89 = vector.load %arg9[%c0_62, %c0_63] : memref<8x1xf32, #tpu.memory_space<vmem>>, vector<8x1xf32>
      %90 = arith.mulf %78, %78 : vector<8x256xf32>
      %cst_64 = arith.constant dense<0.000000e+00> : vector<8xf32>
      %91 = vector.multi_reduction <add>, %90, %cst_64 [1] : vector<8x256xf32> to vector<8xf32>
      %92 = vector.shape_cast %91 : vector<8xf32> to vector<8x1xf32>
      %93 = arith.addf %89, %92 : vector<8x1xf32>
      %c0_65 = arith.constant 0 : index
      %c0_66 = arith.constant 0 : index
      %94 = vector.load %arg9[%c0_65, %c0_66] : memref<8x1xf32, #tpu.memory_space<vmem>>, vector<8x1xf32>
      tpu.vector_store %arg9[%c0_65, %c0_66], %93 {strides = array<i32>} : memref<8x1xf32, #tpu.memory_space<vmem>>, vector<8x1xf32>,
      %c1_67 = arith.constant 1 : index
      %c0_68 = arith.constant 0 : index
      %c0_69 = arith.constant 0 : index
      %95 = vector.load %arg2[%c1_67, %c0_68, %c0_69] : memref<2x4x290xf32, #tpu.memory_space<vmem>>, vector<1x4x256xf32>
      %96 = vector.shape_cast %95 : vector<1x4x256xf32> to vector<4x256xf32>
      %cst_70 = arith.constant 0.000000e+00 : f32
      %97 = vector.broadcast %cst_70 : f32 to vector<4x256xf32>
      %98 = arith.select %34, %96, %97 : vector<4x256xi1>, vector<4x256xf32>
      %c0_71 = arith.constant 0 : index
      %c0_72 = arith.constant 0 : index
      %99 = vector.load %arg6[%c0_71, %c0_72] : memref<36x256xf32, #tpu.memory_space<vmem>>, vector<4x256xf32>
      tpu.vector_store %arg6[%c0_71, %c0_72], %98 {strides = array<i32>} : memref<36x256xf32, #tpu.memory_space<vmem>>, vector<4x256xf32>,
      %c1_73 = arith.constant 1 : index
      %c0_74 = arith.constant 0 : index
      %c1_75 = arith.constant 1 : index
      %100 = vector.load %arg2[%c1_73, %c0_74, %c1_75] : memref<2x4x290xf32, #tpu.memory_space<vmem>>, vector<1x4x256xf32>
      %101 = vector.shape_cast %100 : vector<1x4x256xf32> to vector<4x256xf32>
      %c4_76 = arith.constant 4 : index
      %c0_77 = arith.constant 0 : index
      %102 = vector.load %arg6[%c4_76, %c0_77] : memref<36x256xf32, #tpu.memory_space<vmem>>, vector<4x256xf32>
      tpu.vector_store %arg6[%c4_76, %c0_77], %101 {strides = array<i32>} : memref<36x256xf32, #tpu.memory_space<vmem>>, vector<4x256xf32>,
      %c1_78 = arith.constant 1 : index
      %c0_79 = arith.constant 0 : index
      %c2_80 = arith.constant 2 : index
      %103 = vector.load %arg2[%c1_78, %c0_79, %c2_80] : memref<2x4x290xf32, #tpu.memory_space<vmem>>, vector<1x4x256xf32>
      %104 = vector.shape_cast %103 : vector<1x4x256xf32> to vector<4x256xf32>
      %cst_81 = arith.constant 0.000000e+00 : f32
      %105 = vector.broadcast %cst_81 : f32 to vector<4x256xf32>
      %106 = arith.select %36, %104, %105 : vector<4x256xi1>, vector<4x256xf32>
      %c8_82 = arith.constant 8 : index
      %c0_83 = arith.constant 0 : index
      %107 = vector.load %arg6[%c8_82, %c0_83] : memref<36x256xf32, #tpu.memory_space<vmem>>, vector<4x256xf32>
      tpu.vector_store %arg6[%c8_82, %c0_83], %106 {strides = array<i32>} : memref<36x256xf32, #tpu.memory_space<vmem>>, vector<4x256xf32>,
      %c1_84 = arith.constant 1 : index
      %c0_85 = arith.constant 0 : index
      %c16_86 = arith.constant 16 : index
      %108 = vector.load %arg2[%c1_84, %c0_85, %c16_86] : memref<2x4x290xf32, #tpu.memory_space<vmem>>, vector<1x4x256xf32>
      %109 = vector.shape_cast %108 : vector<1x4x256xf32> to vector<4x256xf32>
      %cst_87 = arith.constant 0.000000e+00 : f32
      %110 = vector.broadcast %cst_87 : f32 to vector<4x256xf32>
      %111 = arith.select %34, %109, %110 : vector<4x256xi1>, vector<4x256xf32>
      %c12_88 = arith.constant 12 : index
      %c0_89 = arith.constant 0 : index
      %112 = vector.load %arg6[%c12_88, %c0_89] : memref<36x256xf32, #tpu.memory_space<vmem>>, vector<4x256xf32>
      tpu.vector_store %arg6[%c12_88, %c0_89], %111 {strides = array<i32>} : memref<36x256xf32, #tpu.memory_space<vmem>>, vector<4x256xf32>,
      %c1_90 = arith.constant 1 : index
      %c0_91 = arith.constant 0 : index
      %c17_92 = arith.constant 17 : index
      %113 = vector.load %arg2[%c1_90, %c0_91, %c17_92] : memref<2x4x290xf32, #tpu.memory_space<vmem>>, vector<1x4x256xf32>
      %114 = vector.shape_cast %113 : vector<1x4x256xf32> to vector<4x256xf32>
      %c16_93 = arith.constant 16 : index
      %c0_94 = arith.constant 0 : index
      %115 = vector.load %arg6[%c16_93, %c0_94] : memref<36x256xf32, #tpu.memory_space<vmem>>, vector<4x256xf32>
      tpu.vector_store %arg6[%c16_93, %c0_94], %114 {strides = array<i32>} : memref<36x256xf32, #tpu.memory_space<vmem>>, vector<4x256xf32>,
      %c1_95 = arith.constant 1 : index
      %c0_96 = arith.constant 0 : index
      %c18_97 = arith.constant 18 : index
      %116 = vector.load %arg2[%c1_95, %c0_96, %c18_97] : memref<2x4x290xf32, #tpu.memory_space<vmem>>, vector<1x4x256xf32>
      %117 = vector.shape_cast %116 : vector<1x4x256xf32> to vector<4x256xf32>
      %cst_98 = arith.constant 0.000000e+00 : f32
      %118 = vector.broadcast %cst_98 : f32 to vector<4x256xf32>
      %119 = arith.select %36, %117, %118 : vector<4x256xi1>, vector<4x256xf32>
      %c20_99 = arith.constant 20 : index
      %c0_100 = arith.constant 0 : index
      %120 = vector.load %arg6[%c20_99, %c0_100] : memref<36x256xf32, #tpu.memory_space<vmem>>, vector<4x256xf32>
      tpu.vector_store %arg6[%c20_99, %c0_100], %119 {strides = array<i32>} : memref<36x256xf32, #tpu.memory_space<vmem>>, vector<4x256xf32>,
      %c1_101 = arith.constant 1 : index
      %c0_102 = arith.constant 0 : index
      %c32_103 = arith.constant 32 : index
      %121 = vector.load %arg2[%c1_101, %c0_102, %c32_103] : memref<2x4x290xf32, #tpu.memory_space<vmem>>, vector<1x4x256xf32>
      %122 = vector.shape_cast %121 : vector<1x4x256xf32> to vector<4x256xf32>
      %cst_104 = arith.constant 0.000000e+00 : f32
      %123 = vector.broadcast %cst_104 : f32 to vector<4x256xf32>
      %124 = arith.select %34, %122, %123 : vector<4x256xi1>, vector<4x256xf32>
      %c24_105 = arith.constant 24 : index
      %c0_106 = arith.constant 0 : index
      %125 = vector.load %arg6[%c24_105, %c0_106] : memref<36x256xf32, #tpu.memory_space<vmem>>, vector<4x256xf32>
      tpu.vector_store %arg6[%c24_105, %c0_106], %124 {strides = array<i32>} : memref<36x256xf32, #tpu.memory_space<vmem>>, vector<4x256xf32>,
      %c1_107 = arith.constant 1 : index
      %c0_108 = arith.constant 0 : index
      %c33_109 = arith.constant 33 : index
      %126 = vector.load %arg2[%c1_107, %c0_108, %c33_109] : memref<2x4x290xf32, #tpu.memory_space<vmem>>, vector<1x4x256xf32>
      %127 = vector.shape_cast %126 : vector<1x4x256xf32> to vector<4x256xf32>
      %c28_110 = arith.constant 28 : index
      %c0_111 = arith.constant 0 : index
      %128 = vector.load %arg6[%c28_110, %c0_111] : memref<36x256xf32, #tpu.memory_space<vmem>>, vector<4x256xf32>
      tpu.vector_store %arg6[%c28_110, %c0_111], %127 {strides = array<i32>} : memref<36x256xf32, #tpu.memory_space<vmem>>, vector<4x256xf32>,
      %c1_112 = arith.constant 1 : index
      %c0_113 = arith.constant 0 : index
      %c34_114 = arith.constant 34 : index
      %129 = vector.load %arg2[%c1_112, %c0_113, %c34_114] : memref<2x4x290xf32, #tpu.memory_space<vmem>>, vector<1x4x256xf32>
      %130 = vector.shape_cast %129 : vector<1x4x256xf32> to vector<4x256xf32>
      %cst_115 = arith.constant 0.000000e+00 : f32
      %131 = vector.broadcast %cst_115 : f32 to vector<4x256xf32>
      %132 = arith.select %36, %130, %131 : vector<4x256xi1>, vector<4x256xf32>
      %c32_116 = arith.constant 32 : index
      %c0_117 = arith.constant 0 : index
      %133 = vector.load %arg6[%c32_116, %c0_117] : memref<36x256xf32, #tpu.memory_space<vmem>>, vector<4x256xf32>
      tpu.vector_store %arg6[%c32_116, %c0_117], %132 {strides = array<i32>} : memref<36x256xf32, #tpu.memory_space<vmem>>, vector<4x256xf32>,
      %c0_118 = arith.constant 0 : index
      %c0_119 = arith.constant 0 : index
      %134 = vector.load %arg3[%c0_118, %c0_119] : memref<8x36xf32, #tpu.memory_space<vmem>>, vector<8x36xf32>
      %c0_120 = arith.constant 0 : index
      %c0_121 = arith.constant 0 : index
      %135 = vector.load %arg6[%c0_120, %c0_121] : memref<36x256xf32, #tpu.memory_space<vmem>>, vector<36x256xf32>
      %cst_122 = arith.constant dense<0.000000e+00> : vector<8x256xf32>
      %136 = tpu.matmul %134, %135, %cst_122 {dimension_numbers = #tpu.dot_dimension_numbers<[1], [0], [0], [1], [0, 0, 1, 1], [], []>} : vector<8x36xf32>, vector<36x256xf32>, vector<8x256xf32> -> vector<8x256xf32>
      %c2_i32_123 = arith.constant 2 : i32
      %137 = arith.muli %arg1, %c2_i32_123 : i32
      %c1_i32_124 = arith.constant 1 : i32
      %138 = arith.addi %137, %c1_i32_124 : i32
      %139 = vector.shape_cast %136 : vector<8x256xf32> to vector<1x8x256xf32>
      %140 = arith.index_cast %138 : i32 to index
      %c0_125 = arith.constant 0 : index
      %c0_126 = arith.constant 0 : index
      %141 = vector.load %arg7[%140, %c0_125, %c0_126] : memref<2x8x256xf32, #tpu.memory_space<vmem>>, vector<1x8x256xf32>
      tpu.vector_store %arg7[%140, %c0_125, %c0_126], %139 {strides = array<i32>} : memref<2x8x256xf32, #tpu.memory_space<vmem>>, vector<1x8x256xf32>,
      %c0_127 = arith.constant 0 : index
      %c0_128 = arith.constant 0 : index
      %142 = vector.load %arg8[%c0_127, %c0_128] : memref<8x1xf32, #tpu.memory_space<vmem>>, vector<8x1xf32>
      %cst_129 = arith.constant dense<0.000000e+00> : vector<8xf32>
      %143 = vector.multi_reduction <add>, %136, %cst_129 [1] : vector<8x256xf32> to vector<8xf32>
      %144 = vector.shape_cast %143 : vector<8xf32> to vector<8x1xf32>
      %145 = arith.addf %142, %144 : vector<8x1xf32>
      %c0_130 = arith.constant 0 : index
      %c0_131 = arith.constant 0 : index
      %146 = vector.load %arg8[%c0_130, %c0_131] : memref<8x1xf32, #tpu.memory_space<vmem>>, vector<8x1xf32>
      tpu.vector_store %arg8[%c0_130, %c0_131], %145 {strides = array<i32>} : memref<8x1xf32, #tpu.memory_space<vmem>>, vector<8x1xf32>,
      %c0_132 = arith.constant 0 : index
      %c0_133 = arith.constant 0 : index
      %147 = vector.load %arg9[%c0_132, %c0_133] : memref<8x1xf32, #tpu.memory_space<vmem>>, vector<8x1xf32>
      %148 = arith.mulf %136, %136 : vector<8x256xf32>
      %cst_134 = arith.constant dense<0.000000e+00> : vector<8xf32>
      %149 = vector.multi_reduction <add>, %148, %cst_134 [1] : vector<8x256xf32> to vector<8xf32>
      %150 = vector.shape_cast %149 : vector<8xf32> to vector<8x1xf32>
      %151 = arith.addf %147, %150 : vector<8x1xf32>
      %c0_135 = arith.constant 0 : index
      %c0_136 = arith.constant 0 : index
      %152 = vector.load %arg9[%c0_135, %c0_136] : memref<8x1xf32, #tpu.memory_space<vmem>>, vector<8x1xf32>
      tpu.vector_store %arg9[%c0_135, %c0_136], %151 {strides = array<i32>} : memref<8x1xf32, #tpu.memory_space<vmem>>, vector<8x1xf32>,
    } else {
    }
    %c1_i32 = arith.constant 1 : i32
    %8 = arith.cmpi eq, %arg0, %c1_i32 : i32
    %c0_i32_4 = arith.constant 0 : i32
    %9 = arith.cmpi eq, %arg1, %c0_i32_4 : i32
    %10 = arith.andi %8, %9 : i1
    %11 = arith.extui %10 : i1 to i32
    %c0_i32_5 = arith.constant 0 : i32
    %12 = arith.cmpi ne, %11, %c0_i32_5 : i32
    scf.if %12 {
      %c0 = arith.constant 0 : index
      %c0_8 = arith.constant 0 : index
      %16 = vector.load %arg8[%c0, %c0_8] : memref<8x1xf32, #tpu.memory_space<vmem>>, vector<8x1xf32>
      %cst = arith.constant 0.001953125 : f32
      %17 = vector.broadcast %cst : f32 to vector<8x1xf32>
      %18 = arith.mulf %16, %17 : vector<8x1xf32>
      %c0_9 = arith.constant 0 : index
      %c0_10 = arith.constant 0 : index
      %19 = vector.load %arg9[%c0_9, %c0_10] : memref<8x1xf32, #tpu.memory_space<vmem>>, vector<8x1xf32>
      %cst_11 = arith.constant 0.001953125 : f32
      %20 = vector.broadcast %cst_11 : f32 to vector<8x1xf32>
      %21 = arith.mulf %19, %20 : vector<8x1xf32>
      %22 = arith.mulf %18, %18 : vector<8x1xf32>
      %23 = arith.subf %21, %22 : vector<8x1xf32>
      %cst_12 = arith.constant 9.99999974E-6 : f32
      %24 = vector.broadcast %cst_12 : f32 to vector<8x1xf32>
      %25 = arith.addf %23, %24 : vector<8x1xf32>
      %26 = math.rsqrt %25 : vector<8x1xf32>
      %c0_13 = arith.constant 0 : index
      %c0_14 = arith.constant 0 : index
      %27 = vector.load %arg4[%c0_13, %c0_14] : memref<8x2xf32, #tpu.memory_space<vmem>>, vector<8x1xf32>
      %28 = arith.mulf %27, %26 : vector<8x1xf32>
      %c0_15 = arith.constant 0 : index
      %c0_16 = arith.constant 0 : index
      %29 = vector.load %arg10[%c0_15, %c0_16] : memref<8x2xf32, #tpu.memory_space<vmem>>, vector<8x1xf32>
      tpu.vector_store %arg10[%c0_15, %c0_16], %28 {strides = array<i32>} : memref<8x2xf32, #tpu.memory_space<vmem>>, vector<8x1xf32>,
      %c0_17 = arith.constant 0 : index
      %c1 = arith.constant 1 : index
      %30 = vector.load %arg4[%c0_17, %c1] : memref<8x2xf32, #tpu.memory_space<vmem>>, vector<8x1xf32>
      %31 = arith.mulf %18, %28 : vector<8x1xf32>
      %32 = arith.subf %30, %31 : vector<8x1xf32>
      %c0_18 = arith.constant 0 : index
      %c1_19 = arith.constant 1 : index
      %33 = vector.load %arg10[%c0_18, %c1_19] : memref<8x2xf32, #tpu.memory_space<vmem>>, vector<8x1xf32>
      tpu.vector_store %arg10[%c0_18, %c1_19], %32 {strides = array<i32>} : memref<8x2xf32, #tpu.memory_space<vmem>>, vector<8x1xf32>,
    } else {
    }
    %c1_i32_6 = arith.constant 1 : i32
    %13 = arith.cmpi eq, %arg0, %c1_i32_6 : i32
    %14 = arith.extui %13 : i1 to i32
    %c0_i32_7 = arith.constant 0 : i32
    %15 = arith.cmpi ne, %14, %c0_i32_7 : i32
    scf.if %15 {
      %c0 = arith.constant 0 : index
      %c0_8 = arith.constant 0 : index
      %16 = vector.load %arg10[%c0, %c0_8] : memref<8x2xf32, #tpu.memory_space<vmem>>, vector<8x1xf32>
      %c0_9 = arith.constant 0 : index
      %c1 = arith.constant 1 : index
      %17 = vector.load %arg10[%c0_9, %c1] : memref<8x2xf32, #tpu.memory_space<vmem>>, vector<8x1xf32>
      %c2_i32 = arith.constant 2 : i32
      %18 = arith.muli %arg1, %c2_i32 : i32
      %c0_i32_10 = arith.constant 0 : i32
      %19 = arith.addi %18, %c0_i32_10 : i32
      %20 = arith.index_cast %19 : i32 to index
      %c0_11 = arith.constant 0 : index
      %c0_12 = arith.constant 0 : index
      %21 = vector.load %arg7[%20, %c0_11, %c0_12] : memref<2x8x256xf32, #tpu.memory_space<vmem>>, vector<1x8x256xf32>
      %22 = vector.shape_cast %21 : vector<1x8x256xf32> to vector<8x256xf32>
      %23 = vector.broadcast %16 : vector<8x1xf32> to vector<8x256xf32>
      %24 = arith.mulf %22, %23 : vector<8x256xf32>
      %25 = vector.broadcast %17 : vector<8x1xf32> to vector<8x256xf32>
      %26 = arith.addf %24, %25 : vector<8x256xf32>
      %cst = arith.constant 0.000000e+00 : f32
      %27 = vector.broadcast %cst : f32 to vector<8x256xf32>
      %28 = arith.cmpf oge, %26, %27 : vector<8x256xf32>
      %cst_13 = arith.constant 2.000000e-01 : f32
      %29 = vector.broadcast %cst_13 : f32 to vector<8x256xf32>
      %30 = arith.mulf %29, %26 : vector<8x256xf32>
      %31 = arith.select %28, %26, %30 : vector<8x256xi1>, vector<8x256xf32>
      %c0_14 = arith.constant 0 : index
      %c0_15 = arith.constant 0 : index
      %c0_16 = arith.constant 0 : index
      %32 = vector.load %arg5[%c0_14, %c0_15, %c0_16] : memref<2x8x256xf32, #tpu.memory_space<vmem>>, vector<1x8x256xf32>
      %33 = vector.shape_cast %32 : vector<1x8x256xf32> to vector<8x256xf32>
      %34 = vector.shape_cast %31 : vector<8x256xf32> to vector<1x8x256xf32>
      tpu.vector_store %arg5[%c0_14, %c0_15, %c0_16], %34 {strides = array<i32>} : memref<2x8x256xf32, #tpu.memory_space<vmem>>, vector<1x8x256xf32>,
      %c2_i32_17 = arith.constant 2 : i32
      %35 = arith.muli %arg1, %c2_i32_17 : i32
      %c1_i32_18 = arith.constant 1 : i32
      %36 = arith.addi %35, %c1_i32_18 : i32
      %37 = arith.index_cast %36 : i32 to index
      %c0_19 = arith.constant 0 : index
      %c0_20 = arith.constant 0 : index
      %38 = vector.load %arg7[%37, %c0_19, %c0_20] : memref<2x8x256xf32, #tpu.memory_space<vmem>>, vector<1x8x256xf32>
      %39 = vector.shape_cast %38 : vector<1x8x256xf32> to vector<8x256xf32>
      %40 = vector.broadcast %16 : vector<8x1xf32> to vector<8x256xf32>
      %41 = arith.mulf %39, %40 : vector<8x256xf32>
      %42 = vector.broadcast %17 : vector<8x1xf32> to vector<8x256xf32>
      %43 = arith.addf %41, %42 : vector<8x256xf32>
      %cst_21 = arith.constant 0.000000e+00 : f32
      %44 = vector.broadcast %cst_21 : f32 to vector<8x256xf32>
      %45 = arith.cmpf oge, %43, %44 : vector<8x256xf32>
      %cst_22 = arith.constant 2.000000e-01 : f32
      %46 = vector.broadcast %cst_22 : f32 to vector<8x256xf32>
      %47 = arith.mulf %46, %43 : vector<8x256xf32>
      %48 = arith.select %45, %43, %47 : vector<8x256xi1>, vector<8x256xf32>
      %c1_23 = arith.constant 1 : index
      %c0_24 = arith.constant 0 : index
      %c0_25 = arith.constant 0 : index
      %49 = vector.load %arg5[%c1_23, %c0_24, %c0_25] : memref<2x8x256xf32, #tpu.memory_space<vmem>>, vector<1x8x256xf32>
      %50 = vector.shape_cast %49 : vector<1x8x256xf32> to vector<8x256xf32>
      %51 = vector.shape_cast %48 : vector<8x256xf32> to vector<1x8x256xf32>
      tpu.vector_store %arg5[%c1_23, %c0_24, %c0_25], %51 {strides = array<i32>} : memref<2x8x256xf32, #tpu.memory_space<vmem>>, vector<1x8x256xf32>,
    } else {
    }
    return
  }
  func.func @transform_0(%arg0: i32, %arg1: i32) -> (i32, i32, i32) {
    %c1_i32 = arith.constant 1 : i32
    %0 = arith.subi %c1_i32, %arg0 : i32
    %1 = arith.muli %arg1, %0 : i32
    %c0_i32 = arith.constant 0 : i32
    %c0_i32_0 = arith.constant 0 : i32
    %c0_i32_1 = arith.constant 0 : i32
    return %1, %c0_i32, %c0_i32_0 : i32, i32, i32
  }
  func.func @transform_1(%arg0: i32, %arg1: i32) -> (i32, i32) {
    %c0_i32 = arith.constant 0 : i32
    %c0_i32_0 = arith.constant 0 : i32
    %c0_i32_1 = arith.constant 0 : i32
    return %c0_i32, %c0_i32_0 : i32, i32
  }
  func.func @transform_2(%arg0: i32, %arg1: i32) -> (i32, i32) {
    %c0_i32 = arith.constant 0 : i32
    %c0_i32_0 = arith.constant 0 : i32
    %c0_i32_1 = arith.constant 0 : i32
    return %c0_i32, %c0_i32_0 : i32, i32
  }
  func.func @transform_3(%arg0: i32, %arg1: i32) -> (i32, i32, i32) {
    %0 = arith.muli %arg1, %arg0 : i32
    %c0_i32 = arith.constant 0 : i32
    %c0_i32_0 = arith.constant 0 : i32
    %c0_i32_1 = arith.constant 0 : i32
    return %0, %c0_i32, %c0_i32_0 : i32, i32, i32
  }
}

</mosaic_0001>

<llo_original>
// kernel: tpu_custom_call.1
$region0: #{tpu_custom_call.1}
  #allocation0 [shape = 'u32[]', space=smem, size = 0x4, offset = 0x4, fixed_abs, tag = 'smem constant byte address 0x4 - core index']
  #allocation1 [shape = 'u32[144,128]{1,0:T(1,128)}', space=vmem, size = 0x12000, scoped, tag = 'internal scratch']
  #allocation2 [shape = 'f32[36,256]{1,0:T(8,128)}', space=vmem, size = 0xa000, scoped, tag = 'scratch operand']
  #allocation3 [shape = 'f32[2,8,256]{2,1,0:T(8,128)}', space=vmem, size = 0x4000, scoped, tag = 'scratch operand']
  #allocation4 [shape = 'f32[8,1]{1,0:T(8,128)}', space=vmem, size = 0x1000, scoped, tag = 'scratch operand']
  #allocation5 [shape = 'f32[8,1]{1,0:T(8,128)}', space=vmem, size = 0x1000, scoped, tag = 'scratch operand']
  #allocation6 [shape = 'f32[8,2]{1,0:T(8,128)}', space=vmem, size = 0x1000, scoped, tag = 'scratch operand']
  %s0 = inlined_call_operand.hbm [shape: f32[2,4,290], index: 0, kind: input, shape index: {}]
  %s1 = inlined_call_operand.vmem [shape: f32[8,36], index: 1, kind: input, shape index: {}]
  %s2 = inlined_call_operand.vmem [shape: f32[8,2], index: 2, kind: input, shape index: {}]
  %s3 = inlined_call_operand.hbm [shape: f32[2,8,256], index: 3, kind: output, shape index: {}]
  %s4 = sld [smem:[#allocation0]]
  $region65: #{tpu_custom_call.1} parent=0
    _
  %s6 = ssub.s32 1, %s4
  %s7 = scalar_select 0, %s6, %s4
  $region1: #{tpu_custom_call.1} parent=0
    #allocation7 [shape = 'u8[24576]{0}', space=vmem, size = 0x6000, scoped, tag = 'input window, operand 0']
    #allocation8 [shape = 's32[2]{0}', space=sflag, size = 0x8, scoped, tag = 'scoped memory for tpu_custom_call.1']
    #allocation9 [shape = 's32[2]{0}', space=sflag, size = 0x8, scoped, tag = 'scoped memory for tpu_custom_call.1']
    #allocation10 [shape = 'u8[32768]{0}', space=vmem, size = 0x8000, scoped, tag = 'output window, operand 0']
    %8 = vsyncpa [#allocation8], 0
    %s9 = scalar_lea.sflag [#allocation8], 1
    %10 = vsyncpa %s9, 0
    %11 = vsyncpa [#allocation9], 0
    %s12 = scalar_lea.sflag [#allocation9], 1
    %13 = vsyncpa %s12, 0
    loop: start=0, step=1, limit=4
    $region2: #{tpu_custom_call.1} parent=1 // loop_pre_header
      _
    $region3: #{tpu_custom_call.1} parent=1 // loop_header
      %s15 = sphi 0, %s19
      %p16 = scmp.ge.s32.totalorder %s15, 4
      %s22 = sphi 0, %s34
      %s23 = sphi 0, %s30
      %s24 = sphi 0, %s22
      %s25 = sphi 0, %s23
      %s26 = sphi 0, %s24
      %s27 = sphi 0, %s25
      %s41 = sphi 0, %s43
      %s44 = sphi 0, %s41
      %s45 = sphi 0, %s44
      %s61 = sphi 0, %s45
      %s65 = sphi 0, %s65
      %s67 = sphi 0, %s65
      %s68 = sphi 0, %s67
      %s82 = sphi 0, %s68
      %s86 = sphi 0, %s86
      %s88 = sphi 0, %s86
      %s89 = sphi 0, %s88
      %s103 = sphi 0, %s89
      %s111 = sphi 0, %s113
      %s114 = sphi 0, %s111
      %s115 = sphi 0, %s114
      %s131 = sphi 0, %s115
    $region4: #{tpu_custom_call.1} parent=1 // loop_header_branch
      %18 = sbr.rel (%p16) target = $region8
    $region5: #{tpu_custom_call.1} parent=1 // loop_body
      %s20 = ssub.s32 %s15, 1
      %s21 = ssub.s32 %s15, 2
      %s28 = sadd.s32 1, %s23
      %p29 = scmp.ge.s32.totalorder %s28, 1
      %s30 = scalar_select %p29, 0, %s28
      %s31 = sadd.s32 1, %s22
      %s32 = scalar_select %p29, %s31, %s22
      %p33 = scmp.ge.s32.totalorder %s32, 2
      %s34 = scalar_select %p33, 0, %s32
      %s35 = ssub.s32 1, %s22
      %s36 = smul.u32 %s23, %s35
      %s37 = ssub.s32 1, %s34
      %s38 = smul.u32 %s30, %s37
      %s39 = ssub.s32 %s36, %s38
      %p40 = scmp.eq.s32.totalorder %s39, 0
      %s42 = sadd.s32 %s41, 1
      %s43 = scalar_select %p40, %s41, %s42
      %p46 = pneg %p40
      %p47 = scmp.eq.s32.totalorder %s15, 1
      %p48 = por %p46, %p47
      %p49 = scmp.ne.s32.totalorder %s41, %s44
      %p50 = scmp.eq.s32.totalorder %s15, 0
      %p51 = por %p49, %p50
      %p52 = scmp.ne.s32.totalorder %s41, %s44
      %p53 = scmp.eq.s32.totalorder %s20, 1
      %p54 = por %p52, %p53
      %p55 = scmp.ne.s32.totalorder %s44, %s45
      %p56 = scmp.eq.s32.totalorder %s20, 0
      %p57 = por %p55, %p56
      %p58 = scmp.ne.s32.totalorder %s44, %s45
      %p59 = scmp.eq.s32.totalorder %s21, 1
      %p60 = por %p58, %p59
      %p62 = scmp.ne.s32.totalorder %s45, %s61
      %p63 = scmp.eq.s32.totalorder %s21, 0
      %p64 = por %p62, %p63
      %s66 = sadd.s32 %s65, 1
      %p69 = scmp.eq.s32.totalorder %s15, 1
      %p70 = scmp.ne.s32.totalorder %s65, %s67
      %p71 = scmp.eq.s32.totalorder %s15, 0
      %p72 = por %p70, %p71
      %p73 = scmp.ne.s32.totalorder %s65, %s67
      %p74 = scmp.eq.s32.totalorder %s20, 1
      %p75 = por %p73, %p74
      %p76 = scmp.ne.s32.totalorder %s67, %s68
      %p77 = scmp.eq.s32.totalorder %s20, 0
      %p78 = por %p76, %p77
      %p79 = scmp.ne.s32.totalorder %s67, %s68
      %p80 = scmp.eq.s32.totalorder %s21, 1
      %p81 = por %p79, %p80
      %p83 = scmp.ne.s32.totalorder %s68, %s82
      %p84 = scmp.eq.s32.totalorder %s21, 0
      %p85 = por %p83, %p84
      %s87 = sadd.s32 %s86, 1
      %p90 = scmp.eq.s32.totalorder %s15, 1
      %p91 = scmp.ne.s32.totalorder %s86, %s88
      %p92 = scmp.eq.s32.totalorder %s15, 0
      %p93 = por %p91, %p92
      %p94 = scmp.ne.s32.totalorder %s86, %s88
      %p95 = scmp.eq.s32.totalorder %s20, 1
      %p96 = por %p94, %p95
      %p97 = scmp.ne.s32.totalorder %s88, %s89
      %p98 = scmp.eq.s32.totalorder %s20, 0
      %p99 = por %p97, %p98
      %p100 = scmp.ne.s32.totalorder %s88, %s89
      %p101 = scmp.eq.s32.totalorder %s21, 1
      %p102 = por %p100, %p101
      %p104 = scmp.ne.s32.totalorder %s89, %s103
      %p105 = scmp.eq.s32.totalorder %s21, 0
      %p106 = por %p104, %p105
      %s107 = smul.u32 %s23, %s22
      %s108 = smul.u32 %s30, %s34
      %s109 = ssub.s32 %s107, %s108
      %p110 = scmp.eq.s32.totalorder %s109, 0
      %s112 = sadd.s32 %s111, 1
      %s113 = scalar_select %p110, %s111, %s112
      %p116 = pneg %p110
      %p117 = scmp.eq.s32.totalorder %s15, 1
      %p118 = por %p116, %p117
      %p119 = scmp.ne.s32.totalorder %s111, %s114
      %p120 = scmp.eq.s32.totalorder %s15, 0
      %p121 = por %p119, %p120
      %p122 = scmp.ne.s32.totalorder %s111, %s114
      %p123 = scmp.eq.s32.totalorder %s20, 1
      %p124 = por %p122, %p123
      %p125 = scmp.ne.s32.totalorder %s114, %s115
      %p126 = scmp.eq.s32.totalorder %s20, 0
      %p127 = por %p125, %p126
      %p128 = scmp.ne.s32.totalorder %s114, %s115
      %p129 = scmp.eq.s32.totalorder %s21, 1
      %p130 = por %p128, %p129
      %p132 = scmp.ne.s32.totalorder %s115, %s131
      %p133 = scmp.eq.s32.totalorder %s21, 0
      %p134 = por %p132, %p133
      %p135 = scmp.le.s32.totalorder 1, %s15
      %p136 = scmp.lt.s32.totalorder %s15, 3
      %p137 = pnand %p135, %p136
      %p138 = pneg %p137
      // Predicated region
      $region9: #{tpu_custom_call.1} parent=5 // pred_check
        _
      $region10: #{tpu_custom_call.1} parent=5 // pred_check_branch
        %140 = sbr.rel (%p137) target = $region12
      $region11: #{tpu_custom_call.1} parent=5 // pred_region
        %s141 = ssub.s32 %s15, 1
        // Predicated region
        $region13: #{tpu_custom_call.1} parent=11 // pred_check
          %p142 = pneg %p78
        $region14: #{tpu_custom_call.1} parent=11 // pred_check_branch
          %144 = sbr.rel (%p142) target = $region16
        $region15: #{tpu_custom_call.1} parent=11 // pred_region
          _
        $region16: #{tpu_custom_call.1} parent=11 // pred_fallthru
          _
        // Predicated region
        $region17: #{tpu_custom_call.1} parent=11 // pred_check
          %p145 = pneg %p99
        $region18: #{tpu_custom_call.1} parent=11 // pred_check_branch
          %147 = sbr.rel (%p145) target = $region20
        $region19: #{tpu_custom_call.1} parent=11 // pred_region
          _
        $region20: #{tpu_custom_call.1} parent=11 // pred_fallthru
          _
      $region12: #{tpu_custom_call.1} parent=5 // pred_fallthru
        _
      %p148 = scmp.lt.s32.totalorder %s15, 2
      // Predicated region
      $region21: #{tpu_custom_call.1} parent=5 // pred_check
        %p149 = pneg %p148
      $region22: #{tpu_custom_call.1} parent=5 // pred_check_branch
        %151 = sbr.rel (%p149) target = $region24
      $region23: #{tpu_custom_call.1} parent=5 // pred_region
        // Predicated region
        $region25: #{tpu_custom_call.1} parent=23 // pred_check
          %p152 = pneg %p51
        $region26: #{tpu_custom_call.1} parent=23 // pred_check_branch
          %154 = sbr.rel (%p152) target = $region28
        $region27: #{tpu_custom_call.1} parent=23 // pred_region
          %s155 = sand.u32 %s41, 1
          %s156 = scalar_lea.sflag [#allocation8], %s155
          %s157 = sand.u32 %s41, 1
          %s158 = smul.addr %s157, 24
          %s159 = scalar_lea.vmem [#allocation7], %s158
          %s160 = ssub.s32 1, %s22
          %s161 = smul.u32 %s23, %s160
          %s162 = smul.u32 2, %s161
          %s164 = ssub.s32 384, 384
          %165 = vsyncadd %s156, %s164
          %s166 = smul.addr %s162, 3
          %s167 = smul.addr %s166, 64
          %s168 = scalar_lea.hbm %s0, %s167
          %s169 = sshll.u32 %s159, 4
          %s170 = int_to_ptr.vmem [resolvable:$true] %s169
          %175 = dma.hbm_to_vmem [thread:$0]  %s168, 384, %s170, %s156, 192, 192, 12
        $region28: #{tpu_custom_call.1} parent=23 // pred_fallthru
          _
      $region24: #{tpu_custom_call.1} parent=5 // pred_fallthru
        _
      %p176 = scmp.le.s32.totalorder 1, %s15
      %p177 = scmp.lt.s32.totalorder %s15, 3
      %p178 = pnand %p176, %p177
      %p179 = pneg %p178
      // Predicated region
      $region29: #{tpu_custom_call.1} parent=5 // pred_check
        _
      $region30: #{tpu_custom_call.1} parent=5 // pred_check_branch
        %181 = sbr.rel (%p178) target = $region32
      $region31: #{tpu_custom_call.1} parent=5 // pred_region
        %s182 = ssub.s32 %s15, 1
        %s183 = sand.u32 %s44, 1
        %s184 = scalar_lea.sflag [#allocation8], %s183
        %s185 = sand.u32 %s44, 1
        %s186 = smul.addr %s185, 24
        %s187 = scalar_lea.vmem [#allocation7], %s186
        // Predicated region
        $region33: #{tpu_custom_call.1} parent=31 // pred_check
          %p188 = pneg %p57
        $region34: #{tpu_custom_call.1} parent=31 // pred_check_branch
          %190 = sbr.rel (%p188) target = $region36
        $region35: #{tpu_custom_call.1} parent=31 // pred_region
          %191 = dma.done %s184, 384
        $region36: #{tpu_custom_call.1} parent=31 // pred_fallthru
          _
        %s192 = sand.u32 %s44, 1
        %s193 = scalar_lea.sflag [#allocation8], %s192
        %s194 = sand.u32 %s44, 1
        %s195 = smul.addr %s194, 24
        %s196 = scalar_lea.vmem [#allocation7], %s195
        %p197 = pneg %p57
        %p198 = pneg %p54
        %p199 = pneg %p78
        %p200 = pneg %p75
        %p201 = pneg %p99
        %p202 = pneg %p96
        %p203 = pneg %p127
        %p204 = pneg %p124
        %s205 = sand.u32 %s114, 1
        %s206 = scalar_lea.sflag [#allocation9], %s205
        %s207 = sand.u32 %s114, 1
        %s208 = smul.addr %s207, 32
        %s209 = scalar_lea.vmem [#allocation10], %s208
        %s210 = ssub.s32 1, %s24
        %s211 = smul.u32 %s25, %s210
        %s212 = smul.u32 2, %s211
        %s213 = smul.u32 %s25, %s24
        %s214 = smul.u32 2, %s213
        %p215 = scmp.eq.s32.totalorder %s24, 0
        %p216 = scmp.eq.s32.totalorder %s25, 0
        %p217 = pnand %p215, %p216
        %p218 = pneg %p217
        // Predicated region
        $region37: #{tpu_custom_call.1} parent=31 // pred_check
          _
        $region38: #{tpu_custom_call.1} parent=31 // pred_check_branch
          %220 = sbr.rel (%p217) target = $region40
        $region39: #{tpu_custom_call.1} parent=31 // pred_region
          %vm221 = vcmask 7168
          %222 = vst.msk [vmem:[#allocation4] sm:$0xff] %vm221, 0.0
          %223 = vst.msk [vmem:[#allocation5] sm:$0xff] %vm221, 0.0
        $region40: #{tpu_custom_call.1} parent=31 // pred_fallthru
          _
        // Predicated region
        $region41: #{tpu_custom_call.1} parent=31 // pred_check
          %p224 = pneg %p215
        $region42: #{tpu_custom_call.1} parent=31 // pred_check_branch
          %226 = sbr.rel (%p224) target = $region44
        $region43: #{tpu_custom_call.1} parent=31 // pred_region
          %v227 = vlaneseq
          %v228 = vand.u32 %v227, 127
          %v229 = vadd.s32 %v228, 128
          %vm230 = vcmp.lt.s32.totalorder %v228, 0
          %v231 = vsub.s32 0, %v228
          %v232 = vsel %vm230, %v231, %v228
          %v233 = vshrl.u32 %v232, 4
          %v234 = vand.u32 %v232, 15
          %v235 = vsub.s32 0, %v234
          %v236 = vsel %vm230, %v235, %v234
          %vm237 = vcmp.lt.s32.totalorder %v229, 0
          %v238 = vsub.s32 0, %v229
          %v239 = vsel %vm237, %v238, %v229
          %v240 = vshrl.u32 %v239, 4
          %v241 = vand.u32 %v239, 15
          %v242 = vsub.s32 0, %v241
          %v243 = vsel %vm237, %v242, %v241
          %vm244 = vcmp.ne.s32.totalorder %v236, 0
          %vm245 = vcmp.ne.s32.totalorder %v243, 0
          %vm246 = vcmp.lt.s32.totalorder %v236, 0
          %vm247 = vcmp.lt.s32.totalorder %v243, 0
          %vm248 = vmand %vm246, %vm244
          %vm249 = vmand %vm247, %vm245
          %v250 = vadd.s32 %v236, 16
          %v251 = vadd.s32 %v243, 16
          %v252 = vsel %vm248, %v250, %v236
          %v253 = vsel %vm249, %v251, %v243
          %vm254 = vcmp.ne.s32.totalorder %v252, 0
          %vm255 = vcmp.ne.s32.totalorder %v253, 0
          %vm256 = vcmp.ne.s32.totalorder %v252, 15
          %vm257 = vcmp.ne.s32.totalorder %v253, 15
          %v258 = vld [vmem:[%s187] sm:$0xff]
          %v260 = vcombine.high %v258, %v258
          %v262 = vsel %vm254, %v258, 0.0
          %v263 = vsel %vm255, %v260, 0.0
          %264 = vst [vmem:[#allocation2] sm:$0xf] %v262
          %265 = vst [vmem:[#allocation2 + $0x8] sm:$0xf] %v263
          %v266 = vld [vmem:[%s187] sm:$0xff]
          %v267 = vld [vmem:[%s187 + $0x8] sm:$0xf]
          %v270 = vcombine.low %v266, %v266
          %v271 = vcombine.low %v267, %v267
          %272 = vrot.lane.b32.xlu0 %v270, 127
          %v273 = vpop.permute.xlu0 %272
          %274 = vrot.lane.b32.xlu0 %v266, 127
          %v275 = vpop.permute.xlu0 %274
          %276 = vrot.lane.b32.xlu0 %v271, 127
          %v277 = vpop.permute.xlu0 %276
          %vm278 = vcmask 1039360
          %v279 = vsel %vm278, %v273, %v275
          %v280 = vsel %vm278, %v275, %v277
          %283 = vst [vmem:[#allocation2] sm:$0xf0] %v279
          %284 = vst [vmem:[#allocation2 + $0x8] sm:$0xf0] %v280
          %v285 = vld [vmem:[%s187] sm:$0xff]
          %v286 = vld [vmem:[%s187 + $0x8] sm:$0xf]
          %v289 = vcombine.high %v285, %v285
          %290 = vrot.lane.b32.xlu0 %v285, 126
          %v291 = vpop.permute.xlu0 %290
          %292 = vrot.lane.b32.xlu0 %v289, 126
          %v293 = vpop.permute.xlu0 %292
          %294 = vrot.lane.b32.xlu0 %v286, 126
          %v295 = vpop.permute.xlu0 %294
          %vm296 = vcmask 1031168
          %v297 = vsel %vm296, %v291, %v293
          %v298 = vsel %vm296, %v293, %v295
          %v301 = vsel %vm256, %v297, 0.0
          %v302 = vsel %vm257, %v298, 0.0
          %303 = vst [vmem:[#allocation2 + $0x10] sm:$0xf] %v301
          %304 = vst [vmem:[#allocation2 + $0x18] sm:$0xf] %v302
          %v305 = vld [vmem:[%s187] sm:$0xff]
          %v306 = vld [vmem:[%s187 + $0x8] sm:$0xf]
          %v309 = vcombine.high %v305, %v305
          %310 = vrot.lane.b32.xlu0 %v305, 112
          %v311 = vpop.permute.xlu0 %310
          %312 = vrot.lane.b32.xlu0 %v309, 112
          %v313 = vpop.permute.xlu0 %312
          %314 = vrot.lane.b32.xlu0 %v306, 112
          %v315 = vpop.permute.xlu0 %314
          %vm316 = vcmask 916480
          %v317 = vsel %vm316, %v311, %v313
          %v318 = vsel %vm316, %v313, %v315
          %v321 = vsel %vm254, %v317, 0.0
          %v322 = vsel %vm255, %v318, 0.0
          %v325 = vrot.slane %v321, 4
          %v326 = vrot.slane %v322, 4
          %329 = vst [vmem:[#allocation2 + $0x10] sm:$0xf0] %v325
          %330 = vst [vmem:[#allocation2 + $0x18] sm:$0xf0] %v326
          %v331 = vld [vmem:[%s187] sm:$0xff]
          %v332 = vld [vmem:[%s187 + $0x8] sm:$0xf]
          %v335 = vcombine.high %v331, %v331
          %336 = vrot.lane.b32.xlu0 %v331, 111
          %v337 = vpop.permute.xlu0 %336
          %338 = vrot.lane.b32.xlu0 %v335, 111
          %v339 = vpop.permute.xlu0 %338
          %340 = vrot.lane.b32.xlu0 %v332, 111
          %v341 = vpop.permute.xlu0 %340
          %vm342 = vcmask 908288
          %v343 = vsel %vm342, %v337, %v339
          %v344 = vsel %vm342, %v339, %v341
          %347 = vst [vmem:[#allocation2 + $0x20] sm:$0xf] %v343
          %348 = vst [vmem:[#allocation2 + $0x28] sm:$0xf] %v344
          %v349 = vld [vmem:[%s187] sm:$0xff]
          %v350 = vld [vmem:[%s187 + $0x8] sm:$0xf]
          %v353 = vcombine.high %v349, %v349
          %354 = vrot.lane.b32.xlu0 %v349, 110
          %v355 = vpop.permute.xlu0 %354
          %356 = vrot.lane.b32.xlu0 %v353, 110
          %v357 = vpop.permute.xlu0 %356
          %358 = vrot.lane.b32.xlu0 %v350, 110
          %v359 = vpop.permute.xlu0 %358
          %vm360 = vcmask 900096
          %v361 = vsel %vm360, %v355, %v357
          %v362 = vsel %vm360, %v357, %v359
          %v365 = vsel %vm256, %v361, 0.0
          %v366 = vsel %vm257, %v362, 0.0
          %v369 = vrot.slane %v365, 4
          %v370 = vrot.slane %v366, 4
          %373 = vst [vmem:[#allocation2 + $0x20] sm:$0xf0] %v369
          %374 = vst [vmem:[#allocation2 + $0x28] sm:$0xf0] %v370
          %v375 = vld [vmem:[%s187] sm:$0xff]
          %v376 = vld [vmem:[%s187 + $0x8] sm:$0xf]
          %v379 = vcombine.high %v375, %v375
          %380 = vrot.lane.b32.xlu0 %v375, 96
          %v381 = vpop.permute.xlu0 %380
          %382 = vrot.lane.b32.xlu0 %v379, 96
          %v383 = vpop.permute.xlu0 %382
          %384 = vrot.lane.b32.xlu0 %v376, 96
          %v385 = vpop.permute.xlu0 %384
          %vm386 = vcmask 785408
          %v387 = vsel %vm386, %v381, %v383
          %v388 = vsel %vm386, %v383, %v385
          %v391 = vsel %vm254, %v387, 0.0
          %v392 = vsel %vm255, %v388, 0.0
          %393 = vst [vmem:[#allocation2 + $0x30] sm:$0xf] %v391
          %394 = vst [vmem:[#allocation2 + $0x38] sm:$0xf] %v392
          %v395 = vld [vmem:[%s187] sm:$0xff]
          %v396 = vld [vmem:[%s187 + $0x8] sm:$0xf]
          %v399 = vcombine.low %v395, %v395
          %v400 = vcombine.low %v396, %v396
          %401 = vrot.lane.b32.xlu0 %v399, 95
          %v402 = vpop.permute.xlu0 %401
          %403 = vrot.lane.b32.xlu0 %v395, 95
          %v404 = vpop.permute.xlu0 %403
          %405 = vrot.lane.b32.xlu0 %v400, 95
          %v406 = vpop.permute.xlu0 %405
          %vm407 = vcmask 777216
          %v408 = vsel %vm407, %v402, %v404
          %v409 = vsel %vm407, %v404, %v406
          %412 = vst [vmem:[#allocation2 + $0x30] sm:$0xf0] %v408
          %413 = vst [vmem:[#allocation2 + $0x38] sm:$0xf0] %v409
          %v414 = vld [vmem:[%s187] sm:$0xff]
          %v415 = vld [vmem:[%s187 + $0x8] sm:$0xf]
          %v418 = vcombine.high %v414, %v414
          %419 = vrot.lane.b32.xlu0 %v414, 94
          %v420 = vpop.permute.xlu0 %419
          %421 = vrot.lane.b32.xlu0 %v418, 94
          %v422 = vpop.permute.xlu0 %421
          %423 = vrot.lane.b32.xlu0 %v415, 94
          %v424 = vpop.permute.xlu0 %423
          %vm425 = vcmask 769024
          %v426 = vsel %vm425, %v420, %v422
          %v427 = vsel %vm425, %v422, %v424
          %v430 = vsel %vm256, %v426, 0.0
          %v431 = vsel %vm257, %v427, 0.0
          %432 = vst [vmem:[#allocation2 + $0x40] sm:$0xf] %v430
          %433 = vst [vmem:[#allocation2 + $0x48] sm:$0xf] %v431
          %v434 = vld [vmem:[%s1] sm:$0xff]
          %v435 = vld [vmem:[#allocation2] sm:$0xff]
          %v436 = vld [vmem:[#allocation2 + $0x8] sm:$0xff]
          %v437 = vld [vmem:[#allocation2 + $0x10] sm:$0xff]
          %v438 = vld [vmem:[#allocation2 + $0x18] sm:$0xff]
          %v439 = vld [vmem:[#allocation2 + $0x20] sm:$0xff]
          %v440 = vld [vmem:[#allocation2 + $0x28] sm:$0xff]
          %v441 = vld [vmem:[#allocation2 + $0x30] sm:$0xff]
          %v442 = vld [vmem:[#allocation2 + $0x38] sm:$0xff]
          %v443 = vld [vmem:[#allocation2 + $0x40] sm:$0xf]
          %v444 = vld [vmem:[#allocation2 + $0x48] sm:$0xf]
          %vm445 = vcmask 293888
          %v447 = vsel %vm445, %v434, 0
          %vm449 = vcmask 1043456
          %v451 = vsel %vm449, %v443, 0
          %v454 = vsel %vm449, %v444, 0
          %456 = vmatprep.subr.mxu0 %v436
          %457 = vmatpush1.msra.mxu0 %v435
          %458 = vmatprep.subr.mxu0 %v438
          %459 = vmatpush1.msra.mxu0 %v437
          %460 = vmatprep.subr.mxu0 %v440
          %461 = vmatpush1.msra.mxu0 %v439
          %462 = vmatprep.subr.mxu0 %v442
          %463 = vmatpush1.msra.mxu0 %v441
          %464 = vmatprep.subr.mxu0 %v454
          %465 = vmatpush1.msra.mxu0 %v451
          %466 = vmatprep.subr.mxu0 0.0
          %467 = vmatpush1.msra.mxu0 0.0
          %468 = vmatprep.subr.mxu0 0.0
          %469 = vmatpush1.msra.mxu0 0.0
          %470 = vmatprep.subr.mxu0 0.0
          %471 = vmatpush1.msra.mxu0 0.0
          %472 = vmatprep.subr.mxu0 0.0
          %473 = vmatpush1.msra.mxu0 0.0
          %474 = vmatprep.subr.mxu0 0.0
          %475 = vmatpush1.msra.mxu0 0.0
          %476 = vmatprep.subr.mxu0 0.0
          %477 = vmatpush1.msra.mxu0 0.0
          %478 = vmatprep.subr.mxu0 0.0
          %479 = vmatpush1.msra.mxu0 0.0
          %480 = vmatprep.subr.mxu0 0.0
          %481 = vmatpush1.msra.mxu0 0.0
          %482 = vmatprep.subr.mxu0 0.0
          %483 = vmatpush1.msra.mxu0 0.0
          %484 = vmatprep.subr.mxu0 0.0
          %485 = vmatpush1.msra.mxu0 0.0
          %486 = vmatprep.subr.mxu0 0.0
          %487 = vmatpush1.msra.mxu0 0.0
          %488 = vmatprep.subr.mxu0 0.0
          %489 = vmatpush1.msra.mxu0 0.0
          %490 = vmatprep.subr.mxu0 0.0
          %491 = vmatpush1.msra.mxu0 0.0
          %492 = vmatprep.subr.mxu0 0.0
          %493 = vmatpush1.msra.mxu0 0.0
          %494 = vmatprep.subr.mxu0 0.0
          %495 = vmatpush1.msra.mxu0 0.0
          %496 = vmatprep.subr.mxu0 0.0
          %497 = vmatpush1.msra.mxu0 0.0
          %498 = vmatprep.subr.mxu0 0.0
          %499 = vmatpush1.msra.mxu0 0.0
          %500 = vmatprep.subr.mxu0 0.0
          %501 = vmatpush1.msra.mxu0 0.0
          %502 = vmatprep.subr.mxu0 0.0
          %503 = vmatpush1.msra.mxu0 0.0
          %504 = vmatprep.subr.mxu0 0.0
          %505 = vmatpush1.msra.mxu0 0.0
          %506 = vmatprep.subr.mxu0 0.0
          %507 = vmatpush1.msra.mxu0 0.0
          %508 = vmatprep.subr.mxu0 0.0
          %509 = vmatpush1.msra.mxu0 0.0
          %510 = vmatprep.subr.mxu0 0.0
          %511 = vmatpush1.msra.mxu0 0.0
          %512 = vmatprep.subr.mxu0 0.0
          %513 = vmatpush1.msra.mxu0 0.0
          %514 = vmatprep.subr.mxu0 0.0
          %515 = vmatpush1.msra.mxu0 0.0
          %516 = vmatprep.subr.mxu0 0.0
          %517 = vmatpush1.msra.mxu0 0.0
          %518 = vmatprep.subr.mxu0 0.0
          %519 = vmatpush1.msra.mxu0 0.0
          %520 = vmatprep.mubr.f32.mxu0 0.0
          %521 = vmatmul.mubr.f32.gmra.mrb[0].mxu0 %v447
          %v522 = vpop.f32.mrb[0].mxu0
          %v523 = vadd.f32 0.0, %v522
          %v524 = vpop.f32.mrb[0].mxu0
          %v525 = vadd.f32 0.0, %v524
          %526 = vdwg.mxu0
          %s527 = smul.u32 %s25, 2
          %s528 = smul.u32 %s527, 2
          %s529 = smul.addr %s528, 8
          %s530 = scalar_lea.vmem [#allocation3], %s529
          %531 = vst [vmem:[%s530] sm:$0xff] %v523
          %532 = vst [vmem:[%s530 + $0x8] sm:$0xff] %v525
          %v533 = vld [vmem:[#allocation4] sm:$0xff]
          %v534 = vadd.f32 %v523, %v525
          %535 = vadd.xlane.f32.xlu0 %v534
          %v536 = vpop.xlane.xlu0 %535
          %v537 = vadd.f32 %v533, %v536
          %vm538 = vcmask 7168
          %539 = vst.msk [vmem:[#allocation4] sm:$0xff] %vm538, %v537
          %v540 = vld [vmem:[#allocation5] sm:$0xff]
          %v541 = vmul.f32 %v523, %v523
          %v542 = vmul.f32 %v525, %v525
          %v543 = vadd.f32 %v541, %v542
          %544 = vadd.xlane.f32.xlu0 %v543
          %v545 = vpop.xlane.xlu0 %544
          %v546 = vadd.f32 %v540, %v545
          %547 = vst.msk [vmem:[#allocation5] sm:$0xff] %vm538, %v546
          %s548 = scalar_lea.vmem %s187, 12 [#allocation7]
          %v549 = vld [vmem:[%s548] sm:$0xff]
          %v551 = vcombine.high %v549, %v549
          %v553 = vsel %vm254, %v549, 0.0
          %v554 = vsel %vm255, %v551, 0.0
          %555 = vst [vmem:[#allocation2] sm:$0xf] %v553
          %556 = vst [vmem:[#allocation2 + $0x8] sm:$0xf] %v554
          %v557 = vld [vmem:[%s548] sm:$0xff]
          %v558 = vld [vmem:[%s548 + $0x8] sm:$0xf]
          %v561 = vcombine.low %v557, %v557
          %v562 = vcombine.low %v558, %v558
          %563 = vrot.lane.b32.xlu0 %v561, 127
          %v564 = vpop.permute.xlu0 %563
          %565 = vrot.lane.b32.xlu0 %v557, 127
          %v566 = vpop.permute.xlu0 %565
          %567 = vrot.lane.b32.xlu0 %v562, 127
          %v568 = vpop.permute.xlu0 %567
          %v569 = vsel %vm278, %v564, %v566
          %v570 = vsel %vm278, %v566, %v568
          %573 = vst [vmem:[#allocation2] sm:$0xf0] %v569
          %574 = vst [vmem:[#allocation2 + $0x8] sm:$0xf0] %v570
          %v575 = vld [vmem:[%s548] sm:$0xff]
          %v576 = vld [vmem:[%s548 + $0x8] sm:$0xf]
          %v579 = vcombine.high %v575, %v575
          %580 = vrot.lane.b32.xlu0 %v575, 126
          %v581 = vpop.permute.xlu0 %580
          %582 = vrot.lane.b32.xlu0 %v579, 126
          %v583 = vpop.permute.xlu0 %582
          %584 = vrot.lane.b32.xlu0 %v576, 126
          %v585 = vpop.permute.xlu0 %584
          %v586 = vsel %vm296, %v581, %v583
          %v587 = vsel %vm296, %v583, %v585
          %v590 = vsel %vm256, %v586, 0.0
          %v591 = vsel %vm257, %v587, 0.0
          %592 = vst [vmem:[#allocation2 + $0x10] sm:$0xf] %v590
          %593 = vst [vmem:[#allocation2 + $0x18] sm:$0xf] %v591
          %v594 = vld [vmem:[%s548] sm:$0xff]
          %v595 = vld [vmem:[%s548 + $0x8] sm:$0xf]
          %v598 = vcombine.high %v594, %v594
          %599 = vrot.lane.b32.xlu0 %v594, 112
          %v600 = vpop.permute.xlu0 %599
          %601 = vrot.lane.b32.xlu0 %v598, 112
          %v602 = vpop.permute.xlu0 %601
          %603 = vrot.lane.b32.xlu0 %v595, 112
          %v604 = vpop.permute.xlu0 %603
          %v605 = vsel %vm316, %v600, %v602
          %v606 = vsel %vm316, %v602, %v604
          %v609 = vsel %vm254, %v605, 0.0
          %v610 = vsel %vm255, %v606, 0.0
          %v613 = vrot.slane %v609, 4
          %v614 = vrot.slane %v610, 4
          %617 = vst [vmem:[#allocation2 + $0x10] sm:$0xf0] %v613
          %618 = vst [vmem:[#allocation2 + $0x18] sm:$0xf0] %v614
          %v619 = vld [vmem:[%s548] sm:$0xff]
          %v620 = vld [vmem:[%s548 + $0x8] sm:$0xf]
          %v623 = vcombine.high %v619, %v619
          %624 = vrot.lane.b32.xlu0 %v619, 111
          %v625 = vpop.permute.xlu0 %624
          %626 = vrot.lane.b32.xlu0 %v623, 111
          %v627 = vpop.permute.xlu0 %626
          %628 = vrot.lane.b32.xlu0 %v620, 111
          %v629 = vpop.permute.xlu0 %628
          %v630 = vsel %vm342, %v625, %v627
          %v631 = vsel %vm342, %v627, %v629
          %634 = vst [vmem:[#allocation2 + $0x20] sm:$0xf] %v630
          %635 = vst [vmem:[#allocation2 + $0x28] sm:$0xf] %v631
          %v636 = vld [vmem:[%s548] sm:$0xff]
          %v637 = vld [vmem:[%s548 + $0x8] sm:$0xf]
          %v640 = vcombine.high %v636, %v636
          %641 = vrot.lane.b32.xlu0 %v636, 110
          %v642 = vpop.permute.xlu0 %641
          %643 = vrot.lane.b32.xlu0 %v640, 110
          %v644 = vpop.permute.xlu0 %643
          %645 = vrot.lane.b32.xlu0 %v637, 110
          %v646 = vpop.permute.xlu0 %645
          %v647 = vsel %vm360, %v642, %v644
          %v648 = vsel %vm360, %v644, %v646
          %v651 = vsel %vm256, %v647, 0.0
          %v652 = vsel %vm257, %v648, 0.0
          %v655 = vrot.slane %v651, 4
          %v656 = vrot.slane %v652, 4
          %659 = vst [vmem:[#allocation2 + $0x20] sm:$0xf0] %v655
          %660 = vst [vmem:[#allocation2 + $0x28] sm:$0xf0] %v656
          %v661 = vld [vmem:[%s548] sm:$0xff]
          %v662 = vld [vmem:[%s548 + $0x8] sm:$0xf]
          %v665 = vcombine.high %v661, %v661
          %666 = vrot.lane.b32.xlu0 %v661, 96
          %v667 = vpop.permute.xlu0 %666
          %668 = vrot.lane.b32.xlu0 %v665, 96
          %v669 = vpop.permute.xlu0 %668
          %670 = vrot.lane.b32.xlu0 %v662, 96
          %v671 = vpop.permute.xlu0 %670
          %v672 = vsel %vm386, %v667, %v669
          %v673 = vsel %vm386, %v669, %v671
          %v676 = vsel %vm254, %v672, 0.0
          %v677 = vsel %vm255, %v673, 0.0
          %678 = vst [vmem:[#allocation2 + $0x30] sm:$0xf] %v676
          %679 = vst [vmem:[#allocation2 + $0x38] sm:$0xf] %v677
          %v680 = vld [vmem:[%s548] sm:$0xff]
          %v681 = vld [vmem:[%s548 + $0x8] sm:$0xf]
          %v684 = vcombine.low %v680, %v680
          %v685 = vcombine.low %v681, %v681
          %686 = vrot.lane.b32.xlu0 %v684, 95
          %v687 = vpop.permute.xlu0 %686
          %688 = vrot.lane.b32.xlu0 %v680, 95
          %v689 = vpop.permute.xlu0 %688
          %690 = vrot.lane.b32.xlu0 %v685, 95
          %v691 = vpop.permute.xlu0 %690
          %v692 = vsel %vm407, %v687, %v689
          %v693 = vsel %vm407, %v689, %v691
          %696 = vst [vmem:[#allocation2 + $0x30] sm:$0xf0] %v692
          %697 = vst [vmem:[#allocation2 + $0x38] sm:$0xf0] %v693
          %v698 = vld [vmem:[%s548] sm:$0xff]
          %v699 = vld [vmem:[%s548 + $0x8] sm:$0xf]
          %v702 = vcombine.high %v698, %v698
          %703 = vrot.lane.b32.xlu0 %v698, 94
          %v704 = vpop.permute.xlu0 %703
          %705 = vrot.lane.b32.xlu0 %v702, 94
          %v706 = vpop.permute.xlu0 %705
          %707 = vrot.lane.b32.xlu0 %v699, 94
          %v708 = vpop.permute.xlu0 %707
          %v709 = vsel %vm425, %v704, %v706
          %v710 = vsel %vm425, %v706, %v708
          %v713 = vsel %vm256, %v709, 0.0
          %v714 = vsel %vm257, %v710, 0.0
          %715 = vst [vmem:[#allocation2 + $0x40] sm:$0xf] %v713
          %716 = vst [vmem:[#allocation2 + $0x48] sm:$0xf] %v714
          %v717 = vld [vmem:[%s1] sm:$0xff]
          %v718 = vld [vmem:[#allocation2] sm:$0xff]
          %v719 = vld [vmem:[#allocation2 + $0x8] sm:$0xff]
          %v720 = vld [vmem:[#allocation2 + $0x10] sm:$0xff]
          %v721 = vld [vmem:[#allocation2 + $0x18] sm:$0xff]
          %v722 = vld [vmem:[#allocation2 + $0x20] sm:$0xff]
          %v723 = vld [vmem:[#allocation2 + $0x28] sm:$0xff]
          %v724 = vld [vmem:[#allocation2 + $0x30] sm:$0xff]
          %v725 = vld [vmem:[#allocation2 + $0x38] sm:$0xff]
          %v726 = vld [vmem:[#allocation2 + $0x40] sm:$0xf]
          %v727 = vld [vmem:[#allocation2 + $0x48] sm:$0xf]
          %v729 = vsel %vm445, %v717, 0
          %v732 = vsel %vm449, %v726, 0
          %v735 = vsel %vm449, %v727, 0
          %737 = vmatprep.subr.mxu0 %v719
          %738 = vmatpush1.msra.mxu0 %v718
          %739 = vmatprep.subr.mxu0 %v721
          %740 = vmatpush1.msra.mxu0 %v720
          %741 = vmatprep.subr.mxu0 %v723
          %742 = vmatpush1.msra.mxu0 %v722
          %743 = vmatprep.subr.mxu0 %v725
          %744 = vmatpush1.msra.mxu0 %v724
          %745 = vmatprep.subr.mxu0 %v735
          %746 = vmatpush1.msra.mxu0 %v732
          %747 = vmatprep.subr.mxu0 0.0
          %748 = vmatpush1.msra.mxu0 0.0
          %749 = vmatprep.subr.mxu0 0.0
          %750 = vmatpush1.msra.mxu0 0.0
          %751 = vmatprep.subr.mxu0 0.0
          %752 = vmatpush1.msra.mxu0 0.0
          %753 = vmatprep.subr.mxu0 0.0
          %754 = vmatpush1.msra.mxu0 0.0
          %755 = vmatprep.subr.mxu0 0.0
          %756 = vmatpush1.msra.mxu0 0.0
          %757 = vmatprep.subr.mxu0 0.0
          %758 = vmatpush1.msra.mxu0 0.0
          %759 = vmatprep.subr.mxu0 0.0
          %760 = vmatpush1.msra.mxu0 0.0
          %761 = vmatprep.subr.mxu0 0.0
          %762 = vmatpush1.msra.mxu0 0.0
          %763 = vmatprep.subr.mxu0 0.0
          %764 = vmatpush1.msra.mxu0 0.0
          %765 = vmatprep.subr.mxu0 0.0
          %766 = vmatpush1.msra.mxu0 0.0
          %767 = vmatprep.subr.mxu0 0.0
          %768 = vmatpush1.msra.mxu0 0.0
          %769 = vmatprep.subr.mxu0 0.0
          %770 = vmatpush1.msra.mxu0 0.0
          %771 = vmatprep.subr.mxu0 0.0
          %772 = vmatpush1.msra.mxu0 0.0
          %773 = vmatprep.subr.mxu0 0.0
          %774 = vmatpush1.msra.mxu0 0.0
          %775 = vmatprep.subr.mxu0 0.0
          %776 = vmatpush1.msra.mxu0 0.0
          %777 = vmatprep.subr.mxu0 0.0
          %778 = vmatpush1.msra.mxu0 0.0
          %779 = vmatprep.subr.mxu0 0.0
          %780 = vmatpush1.msra.mxu0 0.0
          %781 = vmatprep.subr.mxu0 0.0
          %782 = vmatpush1.msra.mxu0 0.0
          %783 = vmatprep.subr.mxu0 0.0
          %784 = vmatpush1.msra.mxu0 0.0
          %785 = vmatprep.subr.mxu0 0.0
          %786 = vmatpush1.msra.mxu0 0.0
          %787 = vmatprep.subr.mxu0 0.0
          %788 = vmatpush1.msra.mxu0 0.0
          %789 = vmatprep.subr.mxu0 0.0
          %790 = vmatpush1.msra.mxu0 0.0
          %791 = vmatprep.subr.mxu0 0.0
          %792 = vmatpush1.msra.mxu0 0.0
          %793 = vmatprep.subr.mxu0 0.0
          %794 = vmatpush1.msra.mxu0 0.0
          %795 = vmatprep.subr.mxu0 0.0
          %796 = vmatpush1.msra.mxu0 0.0
          %797 = vmatprep.subr.mxu0 0.0
          %798 = vmatpush1.msra.mxu0 0.0
          %799 = vmatprep.subr.mxu0 0.0
          %800 = vmatpush1.msra.mxu0 0.0
          %801 = vmatprep.mubr.f32.mxu0 0.0
          %802 = vmatmul.mubr.f32.gmra.mrb[0].mxu0 %v729
          %v803 = vpop.f32.mrb[0].mxu0
          %v804 = vadd.f32 0.0, %v803
          %v805 = vpop.f32.mrb[0].mxu0
          %v806 = vadd.f32 0.0, %v805
          %807 = vdwg.mxu0
          %s808 = sadd.s32 %s527, 1
          %s809 = smul.u32 %s808, 2
          %s810 = smul.addr %s809, 8
          %s811 = scalar_lea.vmem [#allocation3], %s810
          %812 = vst [vmem:[%s811] sm:$0xff] %v804
          %813 = vst [vmem:[%s811 + $0x8] sm:$0xff] %v806
          %v814 = vld [vmem:[#allocation4] sm:$0xff]
          %v815 = vadd.f32 %v804, %v806
          %816 = vadd.xlane.f32.xlu0 %v815
          %v817 = vpop.xlane.xlu0 %816
          %v818 = vadd.f32 %v814, %v817
          %819 = vst.msk [vmem:[#allocation4] sm:$0xff] %vm538, %v818
          %v820 = vld [vmem:[#allocation5] sm:$0xff]
          %v821 = vmul.f32 %v804, %v804
          %v822 = vmul.f32 %v806, %v806
          %v823 = vadd.f32 %v821, %v822
          %824 = vadd.xlane.f32.xlu0 %v823
          %v825 = vpop.xlane.xlu0 %824
          %v826 = vadd.f32 %v820, %v825
          %827 = vst.msk [vmem:[#allocation5] sm:$0xff] %vm538, %v826
        $region44: #{tpu_custom_call.1} parent=31 // pred_fallthru
          _
        %p828 = scmp.eq.s32.totalorder %s24, 1
        %p829 = pnand %p828, %p216
        %p830 = pneg %p829
        // Predicated region
        $region45: #{tpu_custom_call.1} parent=31 // pred_check
          _
        $region46: #{tpu_custom_call.1} parent=31 // pred_check_branch
          %832 = sbr.rel (%p829) target = $region48
        $region47: #{tpu_custom_call.1} parent=31 // pred_region
          %v833 = vld [vmem:[#allocation4] sm:$0xff]
          %v834 = vmul.f32 %v833, 0.001953125
          %v835 = vld [vmem:[#allocation5] sm:$0xff]
          %v836 = vmul.f32 %v835, 0.001953125
          %v837 = vmul.f32 %v834, %v834
          %v838 = vsub.f32 %v836, %v837
          %v839 = vadd.f32 %v838, 1e-05
          %v840 = vrsqrt.pop %v839
          %v841 = vld [vmem:[%s2] sm:$0xff]
          %v842 = vmul.f32 %v841, %v840
          %vm843 = vcmask 7168
          %844 = vst.msk [vmem:[#allocation6] sm:$0xff] %vm843, %v842
          %v845 = vld [vmem:[%s2] sm:$0xff]
          %v846 = vmul.f32 %v834, %v842
          %848 = vrot.lane.b32.xlu0 %v846, 1
          %v849 = vpop.permute.xlu0 %848
          %v851 = vsub.f32 %v845, %v849
          %vm852 = vcmask 15368
          %853 = vst.msk [vmem:[#allocation6] sm:$0xff] %vm852, %v851
        $region48: #{tpu_custom_call.1} parent=31 // pred_fallthru
          _
        // Predicated region
        $region49: #{tpu_custom_call.1} parent=31 // pred_check
          %p854 = pneg %p828
        $region50: #{tpu_custom_call.1} parent=31 // pred_check_branch
          %856 = sbr.rel (%p854) target = $region52
        $region51: #{tpu_custom_call.1} parent=31 // pred_region
          %v857 = vld [vmem:[#allocation6] sm:$0xff]
          %s858 = smul.u32 %s25, 2
          %s859 = smul.u32 %s858, 2
          %s860 = smul.addr %s859, 8
          %s861 = scalar_lea.vmem [#allocation3], %s860
          %v862 = vld [vmem:[%s861] sm:$0xff]
          %v863 = vld [vmem:[%s861 + $0x8] sm:$0xff]
          %865 = vset.pattern.permute.xlu0 0
          %866 = vperm.xlu0 %865, %v857
          %v867 = vpop.permute.xlu0 %866
          %v869 = vmul.f32 %v862, %v867
          %v870 = vmul.f32 %v863, %v867
          %871 = vset.pattern.permute.xlu0 1
          %872 = vperm.xlu0 %871, %v857
          %v873 = vpop.permute.xlu0 %872
          %v875 = vadd.f32 %v869, %v873
          %v876 = vadd.f32 %v870, %v873
          %vm877 = vcmp.ge.f32.partialorder %v875, 0.0
          %vm878 = vcmp.ge.f32.partialorder %v876, 0.0
          %v879 = vmul.f32 %v875, 0.2
          %v880 = vmul.f32 %v876, 0.2
          %v881 = vsel %vm877, %v875, %v879
          %v882 = vsel %vm878, %v876, %v880
          %883 = vst [vmem:[%s209] sm:$0xff] %v881
          %884 = vst [vmem:[%s209 + $0x8] sm:$0xff] %v882
          %s885 = sadd.s32 %s858, 1
          %s886 = smul.u32 %s885, 2
          %s887 = smul.addr %s886, 8
          %s888 = scalar_lea.vmem [#allocation3], %s887
          %v889 = vld [vmem:[%s888] sm:$0xff]
          %v890 = vld [vmem:[%s888 + $0x8] sm:$0xff]
          %v891 = vmul.f32 %v889, %v867
          %v892 = vmul.f32 %v890, %v867
          %v893 = vadd.f32 %v891, %v873
          %v894 = vadd.f32 %v892, %v873
          %vm895 = vcmp.ge.f32.partialorder %v893, 0.0
          %vm896 = vcmp.ge.f32.partialorder %v894, 0.0
          %v897 = vmul.f32 %v893, 0.2
          %v898 = vmul.f32 %v894, 0.2
          %v899 = vsel %vm895, %v893, %v897
          %v900 = vsel %vm896, %v894, %v898
          %s901 = scalar_lea.vmem %s209, 16 [#allocation10]
          %902 = vst [vmem:[%s901] sm:$0xff] %v899
          %903 = vst [vmem:[%s901 + $0x8] sm:$0xff] %v900
        $region52: #{tpu_custom_call.1} parent=31 // pred_fallthru
          _
        %s904 = sand.u32 %s114, 1
        %s905 = scalar_lea.sflag [#allocation9], %s904
        %s906 = sand.u32 %s114, 1
        %s907 = smul.addr %s906, 32
        %s908 = scalar_lea.vmem [#allocation10], %s907
        // Predicated region
        $region53: #{tpu_custom_call.1} parent=31 // pred_check
          %p909 = pneg %p124
        $region54: #{tpu_custom_call.1} parent=31 // pred_check_branch
          %911 = sbr.rel (%p909) target = $region56
        $region55: #{tpu_custom_call.1} parent=31 // pred_region
          %s912 = smul.u32 %s25, %s24
          %s913 = smul.u32 2, %s912
          %s915 = ssub.s32 512, 512
          %916 = vsyncadd %s905, %s915
          %s917 = smul.addr %s913, 2
          %s918 = smul.addr %s917, 128
          %s919 = scalar_lea.hbm %s3, %s918
          %s920 = sshll.u32 %s908, 4
          %s921 = int_to_ptr.vmem [resolvable:$true] %s920
          %926 = dma.vmem_to_hbm [thread:$0]  %s921, 512, %s919, %s905, 256, 256, 16
        $region56: #{tpu_custom_call.1} parent=31 // pred_fallthru
          _
      $region32: #{tpu_custom_call.1} parent=5 // pred_fallthru
        _
      %p927 = scmp.le.s32.totalorder 2, %s15
      // Predicated region
      $region57: #{tpu_custom_call.1} parent=5 // pred_check
        %p928 = pneg %p927
      $region58: #{tpu_custom_call.1} parent=5 // pred_check_branch
        %930 = sbr.rel (%p928) target = $region60
      $region59: #{tpu_custom_call.1} parent=5 // pred_region
        %s931 = ssub.s32 %s15, 2
        // Predicated region
        $region61: #{tpu_custom_call.1} parent=59 // pred_check
          %p932 = pneg %p130
        $region62: #{tpu_custom_call.1} parent=59 // pred_check_branch
          %934 = sbr.rel (%p932) target = $region64
        $region63: #{tpu_custom_call.1} parent=59 // pred_region
          %s935 = sand.u32 %s115, 1
          %s936 = scalar_lea.sflag [#allocation9], %s935
          %s937 = sand.u32 %s115, 1
          %s938 = smul.addr %s937, 32
          %s939 = scalar_lea.vmem [#allocation10], %s938
          %940 = dma.done %s936, 512
        $region64: #{tpu_custom_call.1} parent=59 // pred_fallthru
          _
      $region60: #{tpu_custom_call.1} parent=5 // pred_fallthru
        _
    $region6: #{tpu_custom_call.1} parent=1 // loop_footer
      %s19 = sadd.s32 1, %s15
    $region7: #{tpu_custom_call.1} parent=1 // loop_footer_branch
      %14 = sbr.rel target = $region3
    $region8: #{tpu_custom_call.1} parent=1 // loop_exit
      _
    %941 = vsyncpa [#allocation8], 1
    %s942 = scalar_lea.sflag [#allocation8], 1
    %943 = vsyncpa %s942, 1
    %944 = vsyncpa [#allocation9], 1
    %s945 = scalar_lea.sflag [#allocation9], 1
    %946 = vsyncpa %s945, 1

</llo_original>
